<compile_context>
chip_gen: v7x
topology: tpu7x:2x2x1
jax: 0.10.0
libtpu: 0.0.40
codegen_flags: <defaults>
</compile_context>

<pallas_src>
import functools

import jax
import jax.numpy as jnp
from jax.experimental import pallas as pl
from jax.experimental.pallas import tpu as pltpu

EPS = 1e-5     # nn.BatchNorm2d default eps
LPAD = 128     # left lane padding of the conv scratch (keeps the big interior
               # store 128-lane aligned; tap loads use small static offsets)


def _compiler_params():
    return pltpu.CompilerParams(
        dimension_semantics=("parallel",),        # one image per grid step
        vmem_limit_bytes=32 * 1024 * 1024,        # safe on v5e/v6e/v7x
    )


# --------------------------- in-kernel helpers -------------------------------


def _bn_scale_shift(st, gamma, beta, inv_count):
    """Fold train-mode BN batch stats into per-channel scale/shift (in-kernel).

    st: (N, C, 2) f32 per-image [sum, sum_of_squares]; gamma/beta: (C, 1) f32.
    Biased variance, like PyTorch BatchNorm2d in training mode.
    (E[x^2]-m^2 in f32 is fine at these counts; use Welford for huge batches.)
    """
    s = jnp.sum(st[:, :, 0:1], axis=0)            # (C, 1)
    ss = jnp.sum(st[:, :, 1:2], axis=0)           # (C, 1)
    mean = s * inv_count
    var = jnp.maximum(ss * inv_count - mean * mean, 0.0)
    scale = gamma * jax.lax.rsqrt(var + EPS)
    shift = beta - mean * scale
    return scale, shift


def _conv3x3(act, pad_ref, w_ref, mask_ref, *, H, W):
    """3x3 / stride-1 / pad-1 conv in channel-major layout as one K=9*C GEMM.

    act      : (C_in, H*W) float  channel-major activation (spatial on lanes)
    pad_ref  : (C_in, LPAD + H*W + LPAD) bf16 VMEM scratch (zero border)
    w_ref    : (C_out, 9*C_in) bf16 weights, tap-major along K
    mask_ref : (2, H*W) bf16 column-edge source validity {0,1}: [x>=1, x<=W-2]
    returns  : (C_out, H*W) f32
    """
    rows = H * W
    c_in = act.shape[0]

    # Zero only the border strips; the interior is fully overwritten below.
    # Re-done every step (cheap, aligned) so megacore "parallel" sharding with
    # per-core private scratch stays correct.
    pad_ref[:, :LPAD] = jnp.zeros((c_in, LPAD), pad_ref.dtype)
    pad_ref[:, LPAD + rows:] = jnp.zeros(
        (c_in, pad_ref.shape[1] - LPAD - rows), pad_ref.dtype)
    # Single 128-lane-aligned interior store (bf16 GEMM operand).
    pad_ref[:, LPAD:LPAD + rows] = act.astype(pad_ref.dtype)

    m_left = mask_ref[0:1, :]       # source column x-1 exists
    m_right = mask_ref[1:2, :]      # source column x+1 exists

    # The zero border handles dy (row) out-of-image reads; only the dx column
    # wrap within a row needs masking.  Each tap operand is a contiguous
    # lane-offset load of the flat buffer -- no sublane retiling, no reshape.
    pieces = []
    for ky in range(3):
        for kx in range(3):
            s = (ky - 1) * W + (kx - 1)
            p = pad_ref[:, LPAD + s: LPAD + s + rows]     # (C_in, rows) bf16
            if kx == 0:
                p = p * m_left
            elif kx == 2:
                p = p * m_right
            pieces.append(p)
    patches = jnp.concatenate(pieces, axis=0)             # (9*C_in, rows)
    return jnp.dot(w_ref[...], patches, preferred_element_type=jnp.float32)


# --------------------------- kernels ------------------------------------------


def _conv1_kernel(x_ref, w_ref, mask_ref, h1_ref, st_ref, pad_ref, *, H, W):
    """conv1 on one image + per-image per-channel (sum, sum^2) stats."""
    out = _conv3x3(x_ref[0], pad_ref, w_ref, mask_ref, H=H, W=W)   # (C, rows) f32
    h1_ref[0] = out.astype(h1_ref.dtype)
    st_ref[0, :, 0:1] = jnp.sum(out, axis=1, keepdims=True)
    st_ref[0, :, 1:2] = jnp.sum(out * out, axis=1, keepdims=True)


def _conv2_kernel(h1_ref, st1_ref, g_ref, b_ref, w_ref, mask_ref,
                  h2_ref, st_ref, pad_ref, *, H, W, inv_count):
    """Fused BN1-fold + BN1 + ReLU + conv2 on one image + stats."""
    scale, shift = _bn_scale_shift(st1_ref[...], g_ref[...], b_ref[...],
                                   inv_count)
    a = jnp.maximum(h1_ref[0].astype(jnp.float32) * scale + shift, 0.0)
    out = _conv3x3(a, pad_ref, w_ref, mask_ref, H=H, W=W)
    h2_ref[0] = out.astype(h2_ref.dtype)
    st_ref[0, :, 0:1] = jnp.sum(out, axis=1, keepdims=True)
    st_ref[0, :, 1:2] = jnp.sum(out * out, axis=1, keepdims=True)


def _bn_add_relu_kernel(h2_ref, id_ref, st2_ref, g_ref, b_ref, o_ref, *,
                        inv_count):
    """Fused BN2-fold + BN2 + residual add + ReLU (lane-dense f32 output)."""
    scale, shift = _bn_scale_shift(st2_ref[...], g_ref[...], b_ref[...],
                                   inv_count)
    y = h2_ref[0].astype(jnp.float32) * scale + shift
    o_ref[0] = jnp.maximum(y + id_ref[0], 0.0).astype(o_ref.dtype)


# --------------------------- wrapper ------------------------------------------


def block_forward(x_nchw, params):
    """Forward of `Block` (train-mode BN, stride=1, i_downsample=None)."""
    N, C_in, H, W = x_nchw.shape
    w1, w2 = params["w1"], params["w2"]            # (3, 3, C_in, C_out) HWIO
    g2, b2 = params["g2"], params["b2"]            # forward() uses batch_norm2 twice
    C = w1.shape[-1]
    assert C_in == C, "stride=1 / no-downsample Block needs in_ch == out_ch"
    rows = H * W
    P = LPAD + rows + LPAD
    inv_count = 1.0 / float(N * rows)

    # NCHW -> (N, C, H*W): metadata reshape only, no HBM relayout pass.
    x3 = x_nchw.reshape(N, C, rows).astype(jnp.float32)
    # HWIO (ky,kx,ci,co) -> (co, tap*C_in + ci): tap-major K, bf16 MXU operand.
    w1a = jnp.transpose(w1, (3, 0, 1, 2)).reshape(C, 9 * C).astype(jnp.bfloat16)
    w2a = jnp.transpose(w2, (3, 0, 1, 2)).reshape(C, 9 * C).astype(jnp.bfloat16)
    g2c = g2.reshape(C, 1).astype(jnp.float32)
    b2c = b2.reshape(C, 1).astype(jnp.float32)
    # Column-edge source-validity masks (tiny constants, resident in VMEM).
    col = jnp.arange(rows, dtype=jnp.int32) % W
    masks = jnp.stack([col >= 1, col <= W - 2]).astype(jnp.bfloat16)  # (2, rows)

    cp = _compiler_params()
    act_spec = pl.BlockSpec((1, C, rows), lambda n: (n, 0, 0))
    st_spec = pl.BlockSpec((1, C, 2), lambda n: (n, 0, 0))
    w_spec = pl.BlockSpec((C, 9 * C), lambda n: (0, 0))          # resident
    mask_spec = pl.BlockSpec((2, rows), lambda n: (0, 0))        # resident
    stats_spec = pl.BlockSpec((N, C, 2), lambda n: (0, 0, 0))    # resident
    vec_spec = pl.BlockSpec((C, 1), lambda n: (0, 0))            # resident
    pad_scratch = pltpu.VMEM((C, P), jnp.bfloat16)

    gemm_flops = 2 * N * rows * 9 * C * C

    # ---- pass A: conv1 -> h1 (bf16, channel-major) + per-image stats -------
    h1, st1 = pl.pallas_call(
        functools.partial(_conv1_kernel, H=H, W=W),
        grid=(N,),
        in_specs=[act_spec, w_spec, mask_spec],
        out_specs=[act_spec, st_spec],
        out_shape=[jax.ShapeDtypeStruct((N, C, rows), jnp.bfloat16),
                   jax.ShapeDtypeStruct((N, C, 2), jnp.float32)],
        scratch_shapes=[pad_scratch],
        compiler_params=cp,
        cost_estimate=pl.CostEstimate(
            flops=gemm_flops, transcendentals=0,
            bytes_accessed=N * rows * C * 6 + 9 * C * C * 2),
    )(x3, w1a, masks)

    # ---- pass B: BN1-fold + BN1 + ReLU fused into conv2 -> h2 + stats ------
    h2, st2 = pl.pallas_call(
        functools.partial(_conv2_kernel, H=H, W=W, inv_count=inv_count),
        grid=(N,),
        in_specs=[act_spec, stats_spec, vec_spec, vec_spec, w_spec, mask_spec],
        out_specs=[act_spec, st_spec],
        out_shape=[jax.ShapeDtypeStruct((N, C, rows), jnp.bfloat16),
                   jax.ShapeDtypeStruct((N, C, 2), jnp.float32)],
        scratch_shapes=[pad_scratch],
        compiler_params=cp,
        cost_estimate=pl.CostEstimate(
            flops=gemm_flops + 4 * N * rows * C, transcendentals=2 * N * C,
            bytes_accessed=N * rows * C * 4 + 9 * C * C * 2),
    )(h1, st1, g2c, b2c, w2a, masks)

    # ---- pass C: BN2-fold + BN2 + residual add + ReLU -----------------------
    out = pl.pallas_call(
        functools.partial(_bn_add_relu_kernel, inv_count=inv_count),
        grid=(N,),
        in_specs=[act_spec, act_spec, stats_spec, vec_spec, vec_spec],
        out_specs=act_spec,
        out_shape=jax.ShapeDtypeStruct((N, C, rows), jnp.float32),
        compiler_params=cp,
        cost_estimate=pl.CostEstimate(
            flops=4 * N * rows * C, transcendentals=2 * N * C,
            bytes_accessed=N * rows * C * 10),
    )(h2, x3, st2, g2c, b2c)

    # (N, C, H*W) -> (N, C, H, W): metadata reshape, already NCHW like PyTorch.
    return out.reshape(N, C, H, W)


# --------------------------- reference & test ---------------------------------


def reference(x_nchw, params):
    """Pure-JAX (XLA, f32 HIGHEST) reference matching the PyTorch forward."""
    w1 = jnp.transpose(params["w1"], (3, 2, 0, 1))   # HWIO -> OIHW
    w2 = jnp.transpose(params["w2"], (3, 2, 0, 1))
    g2, b2 = params["g2"], params["b2"]

    def conv(y, w):
        return jax.lax.conv_general_dilated(
            y, w, (1, 1), [(1, 1), (1, 1)],
            dimension_numbers=("NCHW", "OIHW", "NCHW"),
            precision=jax.lax.Precision.HIGHEST)

    def bn(y, g, b):
        m = y.mean(axis=(0, 2, 3), keepdims=True)
        v = ((y - m) ** 2).mean(axis=(0, 2, 3), keepdims=True)
        return ((y - m) * jax.lax.rsqrt(v + EPS) * g.reshape(1, -1, 1, 1)
                + b.reshape(1, -1, 1, 1))

    identity = x_nchw
    h = jnp.maximum(bn(conv(x_nchw, w1), g2, b2), 0.0)   # module bug: BN2 here
    h = bn(conv(h, w2), g2, b2)
    return jnp.maximum(h + identity, 0.0)


if __name__ == "__main__":
    # Block(in_channels=32, out_channels=32), stride=1, i_downsample=None.
    N, H, W, C = 2, 16, 16, 32

    key = jax.random.PRNGKey(0)
    ks = jax.random.split(key, 8)
    f32 = jnp.float32
    params = {
        "w1": 0.1 * jax.random.normal(ks[0], (3, 3, C, C), f32),   # HWIO
        "w2": 0.1 * jax.random.normal(ks[1], (3, 3, C, C), f32),   # HWIO
        # batch_norm1 parameters exist on the module but forward() never uses
        # them (it calls batch_norm2 twice); kept only for fidelity.
        "g1": 1.0 + 0.1 * jax.random.normal(ks[2], (C,), f32),
        "b1": 0.1 * jax.random.normal(ks[3], (C,), f32),
        "g2": 1.0 + 0.1 * jax.random.normal(ks[4], (C,), f32),
        "b2": 0.1 * jax.random.normal(ks[5], (C,), f32),
    }
    x = jax.random.normal(ks[6], (N, C, H, W), f32)

    fwd = jax.jit(block_forward)
    out = jax.block_until_ready(fwd(x, params))
    ref = jax.block_until_ready(reference(x, params))

    assert out.shape == ref.shape == (N, C, H, W)
    err = float(jnp.max(jnp.abs(out - ref)))
    if err > 5e-2:   # bf16 GEMM operands vs f32-HIGHEST reference
        raise AssertionError(f"Pallas result mismatch vs reference: max abs err {err}")
    print("KERNEL_OK")
</pallas_src>

<mosaic_0001>
module attributes {stable_mosaic.version = 11 : i64} {
  func.func @_conv1_kernel(%arg0: i32, %arg1: memref<1x32x256xf32, #tpu.memory_space<vmem>>, %arg2: memref<32x288xbf16, #tpu.memory_space<vmem>>, %arg3: memref<2x256xbf16, #tpu.memory_space<vmem>>, %arg4: memref<1x32x256xbf16, #tpu.memory_space<vmem>>, %arg5: memref<1x32x2xf32, #tpu.memory_space<vmem>>, %arg6: memref<32x512xbf16, #tpu.memory_space<vmem>>) attributes {dimension_semantics = [#tpu.dimension_semantics<parallel>], iteration_bounds = array<i64: 2>, scalar_prefetch = 0 : i64, scratch_operands = 1 : i64, tpu.core_type = #tpu.core_type<tc>, window_params = [{transform_indices = @transform_0, window_bounds = array<i64: 1, 32, 256>}, {pipeline_mode = #tpu.pipeline_mode<synchronous>, transform_indices = @transform_1, window_bounds = array<i64: 32, 288>}, {pipeline_mode = #tpu.pipeline_mode<synchronous>, transform_indices = @transform_2, window_bounds = array<i64: 2, 256>}, {transform_indices = @transform_3, window_bounds = array<i64: 1, 32, 256>}, {transform_indices = @transform_4, window_bounds = array<i64: 1, 32, 2>}]} {
    %c0 = arith.constant 0 : index
    %c0_0 = arith.constant 0 : index
    %c0_1 = arith.constant 0 : index
    %0 = vector.load %arg1[%c0, %c0_0, %c0_1] : memref<1x32x256xf32, #tpu.memory_space<vmem>>, vector<1x32x256xf32>
    %1 = vector.shape_cast %0 : vector<1x32x256xf32> to vector<32x256xf32>
    %cst = arith.constant 0.000000e+00 : bf16
    %2 = vector.broadcast %cst : bf16 to vector<32x128xbf16>
    %c0_2 = arith.constant 0 : index
    %c0_3 = arith.constant 0 : index
    %3 = vector.load %arg6[%c0_2, %c0_3] : memref<32x512xbf16, #tpu.memory_space<vmem>>, vector<32x128xbf16>
    tpu.vector_store %arg6[%c0_2, %c0_3], %2 {strides = array<i32>} : memref<32x512xbf16, #tpu.memory_space<vmem>>, vector<32x128xbf16>,
    %cst_4 = arith.constant 0.000000e+00 : bf16
    %4 = vector.broadcast %cst_4 : bf16 to vector<32x128xbf16>
    %c0_5 = arith.constant 0 : index
    %c384 = arith.constant 384 : index
    %5 = vector.load %arg6[%c0_5, %c384] : memref<32x512xbf16, #tpu.memory_space<vmem>>, vector<32x128xbf16>
    tpu.vector_store %arg6[%c0_5, %c384], %4 {strides = array<i32>} : memref<32x512xbf16, #tpu.memory_space<vmem>>, vector<32x128xbf16>,
    %6 = arith.truncf %1 : vector<32x256xf32> to vector<32x256xbf16>
    %c0_6 = arith.constant 0 : index
    %c128 = arith.constant 128 : index
    %7 = vector.load %arg6[%c0_6, %c128] : memref<32x512xbf16, #tpu.memory_space<vmem>>, vector<32x256xbf16>
    tpu.vector_store %arg6[%c0_6, %c128], %6 {strides = array<i32>} : memref<32x512xbf16, #tpu.memory_space<vmem>>, vector<32x256xbf16>,
    %c0_7 = arith.constant 0 : index
    %c0_8 = arith.constant 0 : index
    %8 = vector.load %arg3[%c0_7, %c0_8] : memref<2x256xbf16, #tpu.memory_space<vmem>>, vector<1x256xbf16>
    %c1 = arith.constant 1 : index
    %c0_9 = arith.constant 0 : index
    %9 = vector.load %arg3[%c1, %c0_9] : memref<2x256xbf16, #tpu.memory_space<vmem>>, vector<1x256xbf16>
    %c0_10 = arith.constant 0 : index
    %c111 = arith.constant 111 : index
    %10 = vector.load %arg6[%c0_10, %c111] : memref<32x512xbf16, #tpu.memory_space<vmem>>, vector<32x256xbf16>
    %11 = vector.broadcast %8 : vector<1x256xbf16> to vector<32x256xbf16>
    %12 = arith.mulf %10, %11 : vector<32x256xbf16>
    %c0_11 = arith.constant 0 : index
    %c112 = arith.constant 112 : index
    %13 = vector.load %arg6[%c0_11, %c112] : memref<32x512xbf16, #tpu.memory_space<vmem>>, vector<32x256xbf16>
    %c0_12 = arith.constant 0 : index
    %c113 = arith.constant 113 : index
    %14 = vector.load %arg6[%c0_12, %c113] : memref<32x512xbf16, #tpu.memory_space<vmem>>, vector<32x256xbf16>
    %15 = vector.broadcast %9 : vector<1x256xbf16> to vector<32x256xbf16>
    %16 = arith.mulf %14, %15 : vector<32x256xbf16>
    %c0_13 = arith.constant 0 : index
    %c127 = arith.constant 127 : index
    %17 = vector.load %arg6[%c0_13, %c127] : memref<32x512xbf16, #tpu.memory_space<vmem>>, vector<32x256xbf16>
    %18 = vector.broadcast %8 : vector<1x256xbf16> to vector<32x256xbf16>
    %19 = arith.mulf %17, %18 : vector<32x256xbf16>
    %c0_14 = arith.constant 0 : index
    %c128_15 = arith.constant 128 : index
    %20 = vector.load %arg6[%c0_14, %c128_15] : memref<32x512xbf16, #tpu.memory_space<vmem>>, vector<32x256xbf16>
    %c0_16 = arith.constant 0 : index
    %c129 = arith.constant 129 : index
    %21 = vector.load %arg6[%c0_16, %c129] : memref<32x512xbf16, #tpu.memory_space<vmem>>, vector<32x256xbf16>
    %22 = vector.broadcast %9 : vector<1x256xbf16> to vector<32x256xbf16>
    %23 = arith.mulf %21, %22 : vector<32x256xbf16>
    %c0_17 = arith.constant 0 : index
    %c143 = arith.constant 143 : index
    %24 = vector.load %arg6[%c0_17, %c143] : memref<32x512xbf16, #tpu.memory_space<vmem>>, vector<32x256xbf16>
    %25 = vector.broadcast %8 : vector<1x256xbf16> to vector<32x256xbf16>
    %26 = arith.mulf %24, %25 : vector<32x256xbf16>
    %c0_18 = arith.constant 0 : index
    %c144 = arith.constant 144 : index
    %27 = vector.load %arg6[%c0_18, %c144] : memref<32x512xbf16, #tpu.memory_space<vmem>>, vector<32x256xbf16>
    %c0_19 = arith.constant 0 : index
    %c145 = arith.constant 145 : index
    %28 = vector.load %arg6[%c0_19, %c145] : memref<32x512xbf16, #tpu.memory_space<vmem>>, vector<32x256xbf16>
    %29 = vector.broadcast %9 : vector<1x256xbf16> to vector<32x256xbf16>
    %30 = arith.mulf %28, %29 : vector<32x256xbf16>
    %31 = tpu.concatenate %12, %13, %16, %19, %20, %23, %26, %27, %30 in 0 : vector<32x256xbf16>, vector<32x256xbf16>, vector<32x256xbf16>, vector<32x256xbf16>, vector<32x256xbf16>, vector<32x256xbf16>, vector<32x256xbf16>, vector<32x256xbf16>, vector<32x256xbf16> -> vector<288x256xbf16>
    %c0_20 = arith.constant 0 : index
    %c0_21 = arith.constant 0 : index
    %32 = vector.load %arg2[%c0_20, %c0_21] : memref<32x288xbf16, #tpu.memory_space<vmem>>, vector<32x288xbf16>
    %cst_22 = arith.constant dense<0.000000e+00> : vector<32x256xf32>
    %33 = tpu.matmul %32, %31, %cst_22 {dimension_numbers = #tpu.dot_dimension_numbers<[1], [0], [0], [1], [0, 0, 1, 1], [], []>} : vector<32x288xbf16>, vector<288x256xbf16>, vector<32x256xf32> -> vector<32x256xf32>
    %34 = arith.truncf %33 : vector<32x256xf32> to vector<32x256xbf16>
    %c0_23 = arith.constant 0 : index
    %c0_24 = arith.constant 0 : index
    %c0_25 = arith.constant 0 : index
    %35 = vector.load %arg4[%c0_23, %c0_24, %c0_25] : memref<1x32x256xbf16, #tpu.memory_space<vmem>>, vector<1x32x256xbf16>
    %36 = vector.shape_cast %35 : vector<1x32x256xbf16> to vector<32x256xbf16>
    %37 = vector.shape_cast %34 : vector<32x256xbf16> to vector<1x32x256xbf16>
    tpu.vector_store %arg4[%c0_23, %c0_24, %c0_25], %37 {strides = array<i32>} : memref<1x32x256xbf16, #tpu.memory_space<vmem>>, vector<1x32x256xbf16>,
    %cst_26 = arith.constant dense<0.000000e+00> : vector<32xf32>
    %38 = vector.multi_reduction <add>, %33, %cst_26 [1] : vector<32x256xf32> to vector<32xf32>
    %39 = vector.shape_cast %38 : vector<32xf32> to vector<32x1xf32>
    %c0_27 = arith.constant 0 : index
    %c0_28 = arith.constant 0 : index
    %c0_29 = arith.constant 0 : index
    %40 = vector.load %arg5[%c0_27, %c0_28, %c0_29] : memref<1x32x2xf32, #tpu.memory_space<vmem>>, vector<1x32x1xf32>
    %41 = vector.shape_cast %40 : vector<1x32x1xf32> to vector<32x1xf32>
    %42 = vector.shape_cast %39 : vector<32x1xf32> to vector<1x32x1xf32>
    tpu.vector_store %arg5[%c0_27, %c0_28, %c0_29], %42 {strides = array<i32>} : memref<1x32x2xf32, #tpu.memory_space<vmem>>, vector<1x32x1xf32>,
    %43 = arith.mulf %33, %33 : vector<32x256xf32>
    %cst_30 = arith.constant dense<0.000000e+00> : vector<32xf32>
    %44 = vector.multi_reduction <add>, %43, %cst_30 [1] : vector<32x256xf32> to vector<32xf32>
    %45 = vector.shape_cast %44 : vector<32xf32> to vector<32x1xf32>
    %c0_31 = arith.constant 0 : index
    %c0_32 = arith.constant 0 : index
    %c1_33 = arith.constant 1 : index
    %46 = vector.load %arg5[%c0_31, %c0_32, %c1_33] : memref<1x32x2xf32, #tpu.memory_space<vmem>>, vector<1x32x1xf32>
    %47 = vector.shape_cast %46 : vector<1x32x1xf32> to vector<32x1xf32>
    %48 = vector.shape_cast %45 : vector<32x1xf32> to vector<1x32x1xf32>
    tpu.vector_store %arg5[%c0_31, %c0_32, %c1_33], %48 {strides = array<i32>} : memref<1x32x2xf32, #tpu.memory_space<vmem>>, vector<1x32x1xf32>,
    return
  }
  func.func @transform_0(%arg0: i32) -> (i32, i32, i32) {
    %c0_i32 = arith.constant 0 : i32
    %c0_i32_0 = arith.constant 0 : i32
    %c0_i32_1 = arith.constant 0 : i32
    return %arg0, %c0_i32, %c0_i32_0 : i32, i32, i32
  }
  func.func @transform_1(%arg0: i32) -> (i32, i32) {
    %c0_i32 = arith.constant 0 : i32
    %c0_i32_0 = arith.constant 0 : i32
    %c0_i32_1 = arith.constant 0 : i32
    return %c0_i32, %c0_i32_0 : i32, i32
  }
  func.func @transform_2(%arg0: i32) -> (i32, i32) {
    %c0_i32 = arith.constant 0 : i32
    %c0_i32_0 = arith.constant 0 : i32
    %c0_i32_1 = arith.constant 0 : i32
    return %c0_i32, %c0_i32_0 : i32, i32
  }
  func.func @transform_3(%arg0: i32) -> (i32, i32, i32) {
    %c0_i32 = arith.constant 0 : i32
    %c0_i32_0 = arith.constant 0 : i32
    %c0_i32_1 = arith.constant 0 : i32
    return %arg0, %c0_i32, %c0_i32_0 : i32, i32, i32
  }
  func.func @transform_4(%arg0: i32) -> (i32, i32, i32) {
    %c0_i32 = arith.constant 0 : i32
    %c0_i32_0 = arith.constant 0 : i32
    %c0_i32_1 = arith.constant 0 : i32
    return %arg0, %c0_i32, %c0_i32_0 : i32, i32, i32
  }
}

module attributes {stable_mosaic.version = 11 : i64} {
  func.func @_conv2_kernel(%arg0: i32, %arg1: memref<1x32x256xbf16, #tpu.memory_space<vmem>>, %arg2: memref<2x32x2xf32, #tpu.memory_space<vmem>>, %arg3: memref<32x1xf32, #tpu.memory_space<vmem>>, %arg4: memref<32x1xf32, #tpu.memory_space<vmem>>, %arg5: memref<32x288xbf16, #tpu.memory_space<vmem>>, %arg6: memref<2x256xbf16, #tpu.memory_space<vmem>>, %arg7: memref<1x32x256xbf16, #tpu.memory_space<vmem>>, %arg8: memref<1x32x2xf32, #tpu.memory_space<vmem>>, %arg9: memref<32x512xbf16, #tpu.memory_space<vmem>>) attributes {dimension_semantics = [#tpu.dimension_semantics<parallel>], iteration_bounds = array<i64: 2>, scalar_prefetch = 0 : i64, scratch_operands = 1 : i64, tpu.core_type = #tpu.core_type<tc>, window_params = [{transform_indices = @transform_0, window_bounds = array<i64: 1, 32, 256>}, {pipeline_mode = #tpu.pipeline_mode<synchronous>, transform_indices = @transform_1, window_bounds = array<i64: 2, 32, 2>}, {pipeline_mode = #tpu.pipeline_mode<synchronous>, transform_indices = @transform_2, window_bounds = array<i64: 32, 1>}, {pipeline_mode = #tpu.pipeline_mode<synchronous>, transform_indices = @transform_3, window_bounds = array<i64: 32, 1>}, {pipeline_mode = #tpu.pipeline_mode<synchronous>, transform_indices = @transform_4, window_bounds = array<i64: 32, 288>}, {pipeline_mode = #tpu.pipeline_mode<synchronous>, transform_indices = @transform_5, window_bounds = array<i64: 2, 256>}, {transform_indices = @transform_6, window_bounds = array<i64: 1, 32, 256>}, {transform_indices = @transform_7, window_bounds = array<i64: 1, 32, 2>}]} {
    %c0 = arith.constant 0 : index
    %c0_0 = arith.constant 0 : index
    %c0_1 = arith.constant 0 : index
    %0 = vector.load %arg2[%c0, %c0_0, %c0_1] : memref<2x32x2xf32, #tpu.memory_space<vmem>>, vector<2x32x2xf32>
    %c0_2 = arith.constant 0 : index
    %c0_3 = arith.constant 0 : index
    %1 = vector.load %arg3[%c0_2, %c0_3] : memref<32x1xf32, #tpu.memory_space<vmem>>, vector<32x1xf32>
    %c0_4 = arith.constant 0 : index
    %c0_5 = arith.constant 0 : index
    %2 = vector.load %arg4[%c0_4, %c0_5] : memref<32x1xf32, #tpu.memory_space<vmem>>, vector<32x1xf32>
    %3 = vector.extract_strided_slice %0 {offsets = [0, 0, 0], sizes = [2, 32, 1], strides = [1, 1, 1]} : vector<2x32x2xf32> to vector<2x32x1xf32>
    %cst = arith.constant dense<0.000000e+00> : vector<32x1xf32>
    %4 = vector.multi_reduction <add>, %3, %cst [0] : vector<2x32x1xf32> to vector<32x1xf32>
    %5 = vector.extract_strided_slice %0 {offsets = [0, 0, 1], sizes = [2, 32, 1], strides = [1, 1, 1]} : vector<2x32x2xf32> to vector<2x32x1xf32>
    %cst_6 = arith.constant dense<0.000000e+00> : vector<32x1xf32>
    %6 = vector.multi_reduction <add>, %5, %cst_6 [0] : vector<2x32x1xf32> to vector<32x1xf32>
    %cst_7 = arith.constant 0.001953125 : f32
    %7 = vector.broadcast %cst_7 : f32 to vector<32x1xf32>
    %8 = arith.mulf %4, %7 : vector<32x1xf32>
    %cst_8 = arith.constant 0.001953125 : f32
    %9 = vector.broadcast %cst_8 : f32 to vector<32x1xf32>
    %10 = arith.mulf %6, %9 : vector<32x1xf32>
    %11 = arith.mulf %8, %8 : vector<32x1xf32>
    %12 = arith.subf %10, %11 : vector<32x1xf32>
    %cst_9 = arith.constant 0.000000e+00 : f32
    %13 = vector.broadcast %cst_9 : f32 to vector<32x1xf32>
    %14 = arith.maximumf %12, %13 : vector<32x1xf32>
    %cst_10 = arith.constant 9.99999974E-6 : f32
    %15 = vector.broadcast %cst_10 : f32 to vector<32x1xf32>
    %16 = arith.addf %14, %15 : vector<32x1xf32>
    %17 = math.rsqrt %16 : vector<32x1xf32>
    %18 = arith.mulf %1, %17 : vector<32x1xf32>
    %19 = arith.mulf %8, %18 : vector<32x1xf32>
    %20 = arith.subf %2, %19 : vector<32x1xf32>
    %c0_11 = arith.constant 0 : index
    %c0_12 = arith.constant 0 : index
    %c0_13 = arith.constant 0 : index
    %21 = vector.load %arg1[%c0_11, %c0_12, %c0_13] : memref<1x32x256xbf16, #tpu.memory_space<vmem>>, vector<1x32x256xbf16>
    %22 = vector.shape_cast %21 : vector<1x32x256xbf16> to vector<32x256xbf16>
    %23 = arith.extf %22 : vector<32x256xbf16> to vector<32x256xf32>
    %24 = vector.broadcast %18 : vector<32x1xf32> to vector<32x256xf32>
    %25 = arith.mulf %23, %24 : vector<32x256xf32>
    %26 = vector.broadcast %20 : vector<32x1xf32> to vector<32x256xf32>
    %27 = arith.addf %25, %26 : vector<32x256xf32>
    %cst_14 = arith.constant 0.000000e+00 : f32
    %28 = vector.broadcast %cst_14 : f32 to vector<32x256xf32>
    %29 = arith.maximumf %27, %28 : vector<32x256xf32>
    %cst_15 = arith.constant 0.000000e+00 : bf16
    %30 = vector.broadcast %cst_15 : bf16 to vector<32x128xbf16>
    %c0_16 = arith.constant 0 : index
    %c0_17 = arith.constant 0 : index
    %31 = vector.load %arg9[%c0_16, %c0_17] : memref<32x512xbf16, #tpu.memory_space<vmem>>, vector<32x128xbf16>
    tpu.vector_store %arg9[%c0_16, %c0_17], %30 {strides = array<i32>} : memref<32x512xbf16, #tpu.memory_space<vmem>>, vector<32x128xbf16>,
    %cst_18 = arith.constant 0.000000e+00 : bf16
    %32 = vector.broadcast %cst_18 : bf16 to vector<32x128xbf16>
    %c0_19 = arith.constant 0 : index
    %c384 = arith.constant 384 : index
    %33 = vector.load %arg9[%c0_19, %c384] : memref<32x512xbf16, #tpu.memory_space<vmem>>, vector<32x128xbf16>
    tpu.vector_store %arg9[%c0_19, %c384], %32 {strides = array<i32>} : memref<32x512xbf16, #tpu.memory_space<vmem>>, vector<32x128xbf16>,
    %34 = arith.truncf %29 : vector<32x256xf32> to vector<32x256xbf16>
    %c0_20 = arith.constant 0 : index
    %c128 = arith.constant 128 : index
    %35 = vector.load %arg9[%c0_20, %c128] : memref<32x512xbf16, #tpu.memory_space<vmem>>, vector<32x256xbf16>
    tpu.vector_store %arg9[%c0_20, %c128], %34 {strides = array<i32>} : memref<32x512xbf16, #tpu.memory_space<vmem>>, vector<32x256xbf16>,
    %c0_21 = arith.constant 0 : index
    %c0_22 = arith.constant 0 : index
    %36 = vector.load %arg6[%c0_21, %c0_22] : memref<2x256xbf16, #tpu.memory_space<vmem>>, vector<1x256xbf16>
    %c1 = arith.constant 1 : index
    %c0_23 = arith.constant 0 : index
    %37 = vector.load %arg6[%c1, %c0_23] : memref<2x256xbf16, #tpu.memory_space<vmem>>, vector<1x256xbf16>
    %c0_24 = arith.constant 0 : index
    %c111 = arith.constant 111 : index
    %38 = vector.load %arg9[%c0_24, %c111] : memref<32x512xbf16, #tpu.memory_space<vmem>>, vector<32x256xbf16>
    %39 = vector.broadcast %36 : vector<1x256xbf16> to vector<32x256xbf16>
    %40 = arith.mulf %38, %39 : vector<32x256xbf16>
    %c0_25 = arith.constant 0 : index
    %c112 = arith.constant 112 : index
    %41 = vector.load %arg9[%c0_25, %c112] : memref<32x512xbf16, #tpu.memory_space<vmem>>, vector<32x256xbf16>
    %c0_26 = arith.constant 0 : index
    %c113 = arith.constant 113 : index
    %42 = vector.load %arg9[%c0_26, %c113] : memref<32x512xbf16, #tpu.memory_space<vmem>>, vector<32x256xbf16>
    %43 = vector.broadcast %37 : vector<1x256xbf16> to vector<32x256xbf16>
    %44 = arith.mulf %42, %43 : vector<32x256xbf16>
    %c0_27 = arith.constant 0 : index
    %c127 = arith.constant 127 : index
    %45 = vector.load %arg9[%c0_27, %c127] : memref<32x512xbf16, #tpu.memory_space<vmem>>, vector<32x256xbf16>
    %46 = vector.broadcast %36 : vector<1x256xbf16> to vector<32x256xbf16>
    %47 = arith.mulf %45, %46 : vector<32x256xbf16>
    %c0_28 = arith.constant 0 : index
    %c128_29 = arith.constant 128 : index
    %48 = vector.load %arg9[%c0_28, %c128_29] : memref<32x512xbf16, #tpu.memory_space<vmem>>, vector<32x256xbf16>
    %c0_30 = arith.constant 0 : index
    %c129 = arith.constant 129 : index
    %49 = vector.load %arg9[%c0_30, %c129] : memref<32x512xbf16, #tpu.memory_space<vmem>>, vector<32x256xbf16>
    %50 = vector.broadcast %37 : vector<1x256xbf16> to vector<32x256xbf16>
    %51 = arith.mulf %49, %50 : vector<32x256xbf16>
    %c0_31 = arith.constant 0 : index
    %c143 = arith.constant 143 : index
    %52 = vector.load %arg9[%c0_31, %c143] : memref<32x512xbf16, #tpu.memory_space<vmem>>, vector<32x256xbf16>
    %53 = vector.broadcast %36 : vector<1x256xbf16> to vector<32x256xbf16>
    %54 = arith.mulf %52, %53 : vector<32x256xbf16>
    %c0_32 = arith.constant 0 : index
    %c144 = arith.constant 144 : index
    %55 = vector.load %arg9[%c0_32, %c144] : memref<32x512xbf16, #tpu.memory_space<vmem>>, vector<32x256xbf16>
    %c0_33 = arith.constant 0 : index
    %c145 = arith.constant 145 : index
    %56 = vector.load %arg9[%c0_33, %c145] : memref<32x512xbf16, #tpu.memory_space<vmem>>, vector<32x256xbf16>
    %57 = vector.broadcast %37 : vector<1x256xbf16> to vector<32x256xbf16>
    %58 = arith.mulf %56, %57 : vector<32x256xbf16>
    %59 = tpu.concatenate %40, %41, %44, %47, %48, %51, %54, %55, %58 in 0 : vector<32x256xbf16>, vector<32x256xbf16>, vector<32x256xbf16>, vector<32x256xbf16>, vector<32x256xbf16>, vector<32x256xbf16>, vector<32x256xbf16>, vector<32x256xbf16>, vector<32x256xbf16> -> vector<288x256xbf16>
    %c0_34 = arith.constant 0 : index
    %c0_35 = arith.constant 0 : index
    %60 = vector.load %arg5[%c0_34, %c0_35] : memref<32x288xbf16, #tpu.memory_space<vmem>>, vector<32x288xbf16>
    %cst_36 = arith.constant dense<0.000000e+00> : vector<32x256xf32>
    %61 = tpu.matmul %60, %59, %cst_36 {dimension_numbers = #tpu.dot_dimension_numbers<[1], [0], [0], [1], [0, 0, 1, 1], [], []>} : vector<32x288xbf16>, vector<288x256xbf16>, vector<32x256xf32> -> vector<32x256xf32>
    %62 = arith.truncf %61 : vector<32x256xf32> to vector<32x256xbf16>
    %c0_37 = arith.constant 0 : index
    %c0_38 = arith.constant 0 : index
    %c0_39 = arith.constant 0 : index
    %63 = vector.load %arg7[%c0_37, %c0_38, %c0_39] : memref<1x32x256xbf16, #tpu.memory_space<vmem>>, vector<1x32x256xbf16>
    %64 = vector.shape_cast %63 : vector<1x32x256xbf16> to vector<32x256xbf16>
    %65 = vector.shape_cast %62 : vector<32x256xbf16> to vector<1x32x256xbf16>
    tpu.vector_store %arg7[%c0_37, %c0_38, %c0_39], %65 {strides = array<i32>} : memref<1x32x256xbf16, #tpu.memory_space<vmem>>, vector<1x32x256xbf16>,
    %cst_40 = arith.constant dense<0.000000e+00> : vector<32xf32>
    %66 = vector.multi_reduction <add>, %61, %cst_40 [1] : vector<32x256xf32> to vector<32xf32>
    %67 = vector.shape_cast %66 : vector<32xf32> to vector<32x1xf32>
    %c0_41 = arith.constant 0 : index
    %c0_42 = arith.constant 0 : index
    %c0_43 = arith.constant 0 : index
    %68 = vector.load %arg8[%c0_41, %c0_42, %c0_43] : memref<1x32x2xf32, #tpu.memory_space<vmem>>, vector<1x32x1xf32>
    %69 = vector.shape_cast %68 : vector<1x32x1xf32> to vector<32x1xf32>
    %70 = vector.shape_cast %67 : vector<32x1xf32> to vector<1x32x1xf32>
    tpu.vector_store %arg8[%c0_41, %c0_42, %c0_43], %70 {strides = array<i32>} : memref<1x32x2xf32, #tpu.memory_space<vmem>>, vector<1x32x1xf32>,
    %71 = arith.mulf %61, %61 : vector<32x256xf32>
    %cst_44 = arith.constant dense<0.000000e+00> : vector<32xf32>
    %72 = vector.multi_reduction <add>, %71, %cst_44 [1] : vector<32x256xf32> to vector<32xf32>
    %73 = vector.shape_cast %72 : vector<32xf32> to vector<32x1xf32>
    %c0_45 = arith.constant 0 : index
    %c0_46 = arith.constant 0 : index
    %c1_47 = arith.constant 1 : index
    %74 = vector.load %arg8[%c0_45, %c0_46, %c1_47] : memref<1x32x2xf32, #tpu.memory_space<vmem>>, vector<1x32x1xf32>
    %75 = vector.shape_cast %74 : vector<1x32x1xf32> to vector<32x1xf32>
    %76 = vector.shape_cast %73 : vector<32x1xf32> to vector<1x32x1xf32>
    tpu.vector_store %arg8[%c0_45, %c0_46, %c1_47], %76 {strides = array<i32>} : memref<1x32x2xf32, #tpu.memory_space<vmem>>, vector<1x32x1xf32>,
    return
  }
  func.func @transform_0(%arg0: i32) -> (i32, i32, i32) {
    %c0_i32 = arith.constant 0 : i32
    %c0_i32_0 = arith.constant 0 : i32
    %c0_i32_1 = arith.constant 0 : i32
    return %arg0, %c0_i32, %c0_i32_0 : i32, i32, i32
  }
  func.func @transform_1(%arg0: i32) -> (i32, i32, i32) {
    %c0_i32 = arith.constant 0 : i32
    %c0_i32_0 = arith.constant 0 : i32
    %c0_i32_1 = arith.constant 0 : i32
    %c0_i32_2 = arith.constant 0 : i32
    return %c0_i32, %c0_i32_0, %c0_i32_1 : i32, i32, i32
  }
  func.func @transform_2(%arg0: i32) -> (i32, i32) {
    %c0_i32 = arith.constant 0 : i32
    %c0_i32_0 = arith.constant 0 : i32
    %c0_i32_1 = arith.constant 0 : i32
    return %c0_i32, %c0_i32_0 : i32, i32
  }
  func.func @transform_3(%arg0: i32) -> (i32, i32) {
    %c0_i32 = arith.constant 0 : i32
    %c0_i32_0 = arith.constant 0 : i32
    %c0_i32_1 = arith.constant 0 : i32
    return %c0_i32, %c0_i32_0 : i32, i32
  }
  func.func @transform_4(%arg0: i32) -> (i32, i32) {
    %c0_i32 = arith.constant 0 : i32
    %c0_i32_0 = arith.constant 0 : i32
    %c0_i32_1 = arith.constant 0 : i32
    return %c0_i32, %c0_i32_0 : i32, i32
  }
  func.func @transform_5(%arg0: i32) -> (i32, i32) {
    %c0_i32 = arith.constant 0 : i32
    %c0_i32_0 = arith.constant 0 : i32
    %c0_i32_1 = arith.constant 0 : i32
    return %c0_i32, %c0_i32_0 : i32, i32
  }
  func.func @transform_6(%arg0: i32) -> (i32, i32, i32) {
    %c0_i32 = arith.constant 0 : i32
    %c0_i32_0 = arith.constant 0 : i32
    %c0_i32_1 = arith.constant 0 : i32
    return %arg0, %c0_i32, %c0_i32_0 : i32, i32, i32
  }
  func.func @transform_7(%arg0: i32) -> (i32, i32, i32) {
    %c0_i32 = arith.constant 0 : i32
    %c0_i32_0 = arith.constant 0 : i32
    %c0_i32_1 = arith.constant 0 : i32
    return %arg0, %c0_i32, %c0_i32_0 : i32, i32, i32
  }
}

module attributes {stable_mosaic.version = 11 : i64} {
  func.func @_bn_add_relu_kernel(%arg0: i32, %arg1: memref<1x32x256xbf16, #tpu.memory_space<vmem>>, %arg2: memref<1x32x256xf32, #tpu.memory_space<vmem>>, %arg3: memref<2x32x2xf32, #tpu.memory_space<vmem>>, %arg4: memref<32x1xf32, #tpu.memory_space<vmem>>, %arg5: memref<32x1xf32, #tpu.memory_space<vmem>>, %arg6: memref<1x32x256xf32, #tpu.memory_space<vmem>>) attributes {dimension_semantics = [#tpu.dimension_semantics<parallel>], iteration_bounds = array<i64: 2>, scalar_prefetch = 0 : i64, scratch_operands = 0 : i64, tpu.core_type = #tpu.core_type<tc>, window_params = [{transform_indices = @transform_0, window_bounds = array<i64: 1, 32, 256>}, {transform_indices = @transform_1, window_bounds = array<i64: 1, 32, 256>}, {pipeline_mode = #tpu.pipeline_mode<synchronous>, transform_indices = @transform_2, window_bounds = array<i64: 2, 32, 2>}, {pipeline_mode = #tpu.pipeline_mode<synchronous>, transform_indices = @transform_3, window_bounds = array<i64: 32, 1>}, {pipeline_mode = #tpu.pipeline_mode<synchronous>, transform_indices = @transform_4, window_bounds = array<i64: 32, 1>}, {transform_indices = @transform_5, window_bounds = array<i64: 1, 32, 256>}]} {
    %c0 = arith.constant 0 : index
    %c0_0 = arith.constant 0 : index
    %c0_1 = arith.constant 0 : index
    %0 = vector.load %arg3[%c0, %c0_0, %c0_1] : memref<2x32x2xf32, #tpu.memory_space<vmem>>, vector<2x32x2xf32>
    %c0_2 = arith.constant 0 : index
    %c0_3 = arith.constant 0 : index
    %1 = vector.load %arg4[%c0_2, %c0_3] : memref<32x1xf32, #tpu.memory_space<vmem>>, vector<32x1xf32>
    %c0_4 = arith.constant 0 : index
    %c0_5 = arith.constant 0 : index
    %2 = vector.load %arg5[%c0_4, %c0_5] : memref<32x1xf32, #tpu.memory_space<vmem>>, vector<32x1xf32>
    %3 = vector.extract_strided_slice %0 {offsets = [0, 0, 0], sizes = [2, 32, 1], strides = [1, 1, 1]} : vector<2x32x2xf32> to vector<2x32x1xf32>
    %cst = arith.constant dense<0.000000e+00> : vector<32x1xf32>
    %4 = vector.multi_reduction <add>, %3, %cst [0] : vector<2x32x1xf32> to vector<32x1xf32>
    %5 = vector.extract_strided_slice %0 {offsets = [0, 0, 1], sizes = [2, 32, 1], strides = [1, 1, 1]} : vector<2x32x2xf32> to vector<2x32x1xf32>
    %cst_6 = arith.constant dense<0.000000e+00> : vector<32x1xf32>
    %6 = vector.multi_reduction <add>, %5, %cst_6 [0] : vector<2x32x1xf32> to vector<32x1xf32>
    %cst_7 = arith.constant 0.001953125 : f32
    %7 = vector.broadcast %cst_7 : f32 to vector<32x1xf32>
    %8 = arith.mulf %4, %7 : vector<32x1xf32>
    %cst_8 = arith.constant 0.001953125 : f32
    %9 = vector.broadcast %cst_8 : f32 to vector<32x1xf32>
    %10 = arith.mulf %6, %9 : vector<32x1xf32>
    %11 = arith.mulf %8, %8 : vector<32x1xf32>
    %12 = arith.subf %10, %11 : vector<32x1xf32>
    %cst_9 = arith.constant 0.000000e+00 : f32
    %13 = vector.broadcast %cst_9 : f32 to vector<32x1xf32>
    %14 = arith.maximumf %12, %13 : vector<32x1xf32>
    %cst_10 = arith.constant 9.99999974E-6 : f32
    %15 = vector.broadcast %cst_10 : f32 to vector<32x1xf32>
    %16 = arith.addf %14, %15 : vector<32x1xf32>
    %17 = math.rsqrt %16 : vector<32x1xf32>
    %18 = arith.mulf %1, %17 : vector<32x1xf32>
    %19 = arith.mulf %8, %18 : vector<32x1xf32>
    %20 = arith.subf %2, %19 : vector<32x1xf32>
    %c0_11 = arith.constant 0 : index
    %c0_12 = arith.constant 0 : index
    %c0_13 = arith.constant 0 : index
    %21 = vector.load %arg1[%c0_11, %c0_12, %c0_13] : memref<1x32x256xbf16, #tpu.memory_space<vmem>>, vector<1x32x256xbf16>
    %22 = vector.shape_cast %21 : vector<1x32x256xbf16> to vector<32x256xbf16>
    %23 = arith.extf %22 : vector<32x256xbf16> to vector<32x256xf32>
    %24 = vector.broadcast %18 : vector<32x1xf32> to vector<32x256xf32>
    %25 = arith.mulf %23, %24 : vector<32x256xf32>
    %26 = vector.broadcast %20 : vector<32x1xf32> to vector<32x256xf32>
    %27 = arith.addf %25, %26 : vector<32x256xf32>
    %c0_14 = arith.constant 0 : index
    %c0_15 = arith.constant 0 : index
    %c0_16 = arith.constant 0 : index
    %28 = vector.load %arg2[%c0_14, %c0_15, %c0_16] : memref<1x32x256xf32, #tpu.memory_space<vmem>>, vector<1x32x256xf32>
    %29 = vector.shape_cast %28 : vector<1x32x256xf32> to vector<32x256xf32>
    %30 = arith.addf %27, %29 : vector<32x256xf32>
    %cst_17 = arith.constant 0.000000e+00 : f32
    %31 = vector.broadcast %cst_17 : f32 to vector<32x256xf32>
    %32 = arith.maximumf %30, %31 : vector<32x256xf32>
    %c0_18 = arith.constant 0 : index
    %c0_19 = arith.constant 0 : index
    %c0_20 = arith.constant 0 : index
    %33 = vector.load %arg6[%c0_18, %c0_19, %c0_20] : memref<1x32x256xf32, #tpu.memory_space<vmem>>, vector<1x32x256xf32>
    %34 = vector.shape_cast %33 : vector<1x32x256xf32> to vector<32x256xf32>
    %35 = vector.shape_cast %32 : vector<32x256xf32> to vector<1x32x256xf32>
    tpu.vector_store %arg6[%c0_18, %c0_19, %c0_20], %35 {strides = array<i32>} : memref<1x32x256xf32, #tpu.memory_space<vmem>>, vector<1x32x256xf32>,
    return
  }
  func.func @transform_0(%arg0: i32) -> (i32, i32, i32) {
    %c0_i32 = arith.constant 0 : i32
    %c0_i32_0 = arith.constant 0 : i32
    %c0_i32_1 = arith.constant 0 : i32
    return %arg0, %c0_i32, %c0_i32_0 : i32, i32, i32
  }
  func.func @transform_1(%arg0: i32) -> (i32, i32, i32) {
    %c0_i32 = arith.constant 0 : i32
    %c0_i32_0 = arith.constant 0 : i32
    %c0_i32_1 = arith.constant 0 : i32
    return %arg0, %c0_i32, %c0_i32_0 : i32, i32, i32
  }
  func.func @transform_2(%arg0: i32) -> (i32, i32, i32) {
    %c0_i32 = arith.constant 0 : i32
    %c0_i32_0 = arith.constant 0 : i32
    %c0_i32_1 = arith.constant 0 : i32
    %c0_i32_2 = arith.constant 0 : i32
    return %c0_i32, %c0_i32_0, %c0_i32_1 : i32, i32, i32
  }
  func.func @transform_3(%arg0: i32) -> (i32, i32) {
    %c0_i32 = arith.constant 0 : i32
    %c0_i32_0 = arith.constant 0 : i32
    %c0_i32_1 = arith.constant 0 : i32
    return %c0_i32, %c0_i32_0 : i32, i32
  }
  func.func @transform_4(%arg0: i32) -> (i32, i32) {
    %c0_i32 = arith.constant 0 : i32
    %c0_i32_0 = arith.constant 0 : i32
    %c0_i32_1 = arith.constant 0 : i32
    return %c0_i32, %c0_i32_0 : i32, i32
  }
  func.func @transform_5(%arg0: i32) -> (i32, i32, i32) {
    %c0_i32 = arith.constant 0 : i32
    %c0_i32_0 = arith.constant 0 : i32
    %c0_i32_1 = arith.constant 0 : i32
    return %arg0, %c0_i32, %c0_i32_0 : i32, i32, i32
  }
}

</mosaic_0001>

<llo_original>
// kernel: block_forward.5
$region0: #{block_forward.5}
  #allocation0 [shape = 'u32[]', space=smem, size = 0x4, offset = 0x4, fixed_abs, tag = 'smem constant byte address 0x4 - core index']
  #allocation1 [shape = 'u32[144,128]{1,0:T(1,128)}', space=vmem, size = 0x12000, scoped, tag = 'internal scratch']
  %s0 = inlined_call_operand.vmem [shape: bf16[2,32,256], index: 0, kind: input, shape index: {}]
  %s1 = inlined_call_operand.vmem [shape: f32[2,32,256], index: 1, kind: input, shape index: {}]
  %s2 = inlined_call_operand.vmem [shape: f32[2,32,2], index: 2, kind: input, shape index: {}]
  %s3 = inlined_call_operand.vmem [shape: f32[32,1], index: 3, kind: input, shape index: {}]
  %s4 = inlined_call_operand.vmem [shape: f32[32,1], index: 4, kind: input, shape index: {}]
  %s5 = inlined_call_operand.vmem [shape: f32[2,32,256], index: 5, kind: output, shape index: {}]
  %s6 = sld [smem:[#allocation0]]
  $region53: #{block_forward.5} parent=0
    _
  %s8 = ssub.s32 1, %s6
  %s9 = scalar_select 0, %s8, %s6
  loop: start=0, step=1, limit=4
  $region2: #{block_forward.5} parent=0 // loop_pre_header
    _
  $region3: #{block_forward.5} parent=0 // loop_header
    %s11 = sphi 0, %s15
    %p12 = scmp.ge.s32.totalorder %s11, 4
    %s21 = sphi 0, %s23
    %s24 = sphi 0, %s21
    %s25 = sphi 0, %s24
    %s41 = sphi 0, %s25
    %s47 = sphi 0, %s49
    %s50 = sphi 0, %s47
    %s51 = sphi 0, %s50
    %s67 = sphi 0, %s51
    %s71 = sphi 0, %s71
    %s73 = sphi 0, %s71
    %s74 = sphi 0, %s73
    %s88 = sphi 0, %s74
    %s92 = sphi 0, %s92
    %s94 = sphi 0, %s92
    %s95 = sphi 0, %s94
    %s109 = sphi 0, %s95
    %s113 = sphi 0, %s113
    %s115 = sphi 0, %s113
    %s116 = sphi 0, %s115
    %s130 = sphi 0, %s116
    %s136 = sphi 0, %s138
    %s139 = sphi 0, %s136
    %s140 = sphi 0, %s139
    %s156 = sphi 0, %s140
  $region4: #{block_forward.5} parent=0 // loop_header_branch
    %14 = sbr.rel (%p12) target = $region8
  $region5: #{block_forward.5} parent=0 // loop_body
    %s16 = ssub.s32 %s11, 1
    %s17 = ssub.s32 %s11, 2
    %s18 = sadd.s32 %s11, 1
    %s19 = ssub.s32 %s11, %s18
    %p20 = scmp.eq.s32.totalorder %s19, 0
    %s22 = sadd.s32 %s21, 1
    %s23 = scalar_select %p20, %s21, %s22
    %p26 = pneg %p20
    %p27 = scmp.eq.s32.totalorder %s11, 1
    %p28 = por %p26, %p27
    %p29 = scmp.ne.s32.totalorder %s21, %s24
    %p30 = scmp.eq.s32.totalorder %s11, 0
    %p31 = por %p29, %p30
    %p32 = scmp.ne.s32.totalorder %s21, %s24
    %p33 = scmp.eq.s32.totalorder %s16, 1
    %p34 = por %p32, %p33
    %p35 = scmp.ne.s32.totalorder %s24, %s25
    %p36 = scmp.eq.s32.totalorder %s16, 0
    %p37 = por %p35, %p36
    %p38 = scmp.ne.s32.totalorder %s24, %s25
    %p39 = scmp.eq.s32.totalorder %s17, 1
    %p40 = por %p38, %p39
    %p42 = scmp.ne.s32.totalorder %s25, %s41
    %p43 = scmp.eq.s32.totalorder %s17, 0
    %p44 = por %p42, %p43
    %s45 = ssub.s32 %s11, %s18
    %p46 = scmp.eq.s32.totalorder %s45, 0
    %s48 = sadd.s32 %s47, 1
    %s49 = scalar_select %p46, %s47, %s48
    %p52 = pneg %p46
    %p53 = scmp.eq.s32.totalorder %s11, 1
    %p54 = por %p52, %p53
    %p55 = scmp.ne.s32.totalorder %s47, %s50
    %p56 = scmp.eq.s32.totalorder %s11, 0
    %p57 = por %p55, %p56
    %p58 = scmp.ne.s32.totalorder %s47, %s50
    %p59 = scmp.eq.s32.totalorder %s16, 1
    %p60 = por %p58, %p59
    %p61 = scmp.ne.s32.totalorder %s50, %s51
    %p62 = scmp.eq.s32.totalorder %s16, 0
    %p63 = por %p61, %p62
    %p64 = scmp.ne.s32.totalorder %s50, %s51
    %p65 = scmp.eq.s32.totalorder %s17, 1
    %p66 = por %p64, %p65
    %p68 = scmp.ne.s32.totalorder %s51, %s67
    %p69 = scmp.eq.s32.totalorder %s17, 0
    %p70 = por %p68, %p69
    %s72 = sadd.s32 %s71, 1
    %p75 = scmp.eq.s32.totalorder %s11, 1
    %p76 = scmp.ne.s32.totalorder %s71, %s73
    %p77 = scmp.eq.s32.totalorder %s11, 0
    %p78 = por %p76, %p77
    %p79 = scmp.ne.s32.totalorder %s71, %s73
    %p80 = scmp.eq.s32.totalorder %s16, 1
    %p81 = por %p79, %p80
    %p82 = scmp.ne.s32.totalorder %s73, %s74
    %p83 = scmp.eq.s32.totalorder %s16, 0
    %p84 = por %p82, %p83
    %p85 = scmp.ne.s32.totalorder %s73, %s74
    %p86 = scmp.eq.s32.totalorder %s17, 1
    %p87 = por %p85, %p86
    %p89 = scmp.ne.s32.totalorder %s74, %s88
    %p90 = scmp.eq.s32.totalorder %s17, 0
    %p91 = por %p89, %p90
    %s93 = sadd.s32 %s92, 1
    %p96 = scmp.eq.s32.totalorder %s11, 1
    %p97 = scmp.ne.s32.totalorder %s92, %s94
    %p98 = scmp.eq.s32.totalorder %s11, 0
    %p99 = por %p97, %p98
    %p100 = scmp.ne.s32.totalorder %s92, %s94
    %p101 = scmp.eq.s32.totalorder %s16, 1
    %p102 = por %p100, %p101
    %p103 = scmp.ne.s32.totalorder %s94, %s95
    %p104 = scmp.eq.s32.totalorder %s16, 0
    %p105 = por %p103, %p104
    %p106 = scmp.ne.s32.totalorder %s94, %s95
    %p107 = scmp.eq.s32.totalorder %s17, 1
    %p108 = por %p106, %p107
    %p110 = scmp.ne.s32.totalorder %s95, %s109
    %p111 = scmp.eq.s32.totalorder %s17, 0
    %p112 = por %p110, %p111
    %s114 = sadd.s32 %s113, 1
    %p117 = scmp.eq.s32.totalorder %s11, 1
    %p118 = scmp.ne.s32.totalorder %s113, %s115
    %p119 = scmp.eq.s32.totalorder %s11, 0
    %p120 = por %p118, %p119
    %p121 = scmp.ne.s32.totalorder %s113, %s115
    %p122 = scmp.eq.s32.totalorder %s16, 1
    %p123 = por %p121, %p122
    %p124 = scmp.ne.s32.totalorder %s115, %s116
    %p125 = scmp.eq.s32.totalorder %s16, 0
    %p126 = por %p124, %p125
    %p127 = scmp.ne.s32.totalorder %s115, %s116
    %p128 = scmp.eq.s32.totalorder %s17, 1
    %p129 = por %p127, %p128
    %p131 = scmp.ne.s32.totalorder %s116, %s130
    %p132 = scmp.eq.s32.totalorder %s17, 0
    %p133 = por %p131, %p132
    %s134 = ssub.s32 %s11, %s18
    %p135 = scmp.eq.s32.totalorder %s134, 0
    %s137 = sadd.s32 %s136, 1
    %s138 = scalar_select %p135, %s136, %s137
    %p141 = pneg %p135
    %p142 = scmp.eq.s32.totalorder %s11, 1
    %p143 = por %p141, %p142
    %p144 = scmp.ne.s32.totalorder %s136, %s139
    %p145 = scmp.eq.s32.totalorder %s11, 0
    %p146 = por %p144, %p145
    %p147 = scmp.ne.s32.totalorder %s136, %s139
    %p148 = scmp.eq.s32.totalorder %s16, 1
    %p149 = por %p147, %p148
    %p150 = scmp.ne.s32.totalorder %s139, %s140
    %p151 = scmp.eq.s32.totalorder %s16, 0
    %p152 = por %p150, %p151
    %p153 = scmp.ne.s32.totalorder %s139, %s140
    %p154 = scmp.eq.s32.totalorder %s17, 1
    %p155 = por %p153, %p154
    %p157 = scmp.ne.s32.totalorder %s140, %s156
    %p158 = scmp.eq.s32.totalorder %s17, 0
    %p159 = por %p157, %p158
    %p160 = scmp.le.s32.totalorder 1, %s11
    %p161 = scmp.lt.s32.totalorder %s11, 3
    %p162 = pnand %p160, %p161
    %p163 = pneg %p162
    // Predicated region
    $region9: #{block_forward.5} parent=5 // pred_check
      _
    $region10: #{block_forward.5} parent=5 // pred_check_branch
      %165 = sbr.rel (%p162) target = $region12
    $region11: #{block_forward.5} parent=5 // pred_region
      %s166 = ssub.s32 %s11, 1
      // Predicated region
      $region13: #{block_forward.5} parent=11 // pred_check
        %p167 = pneg %p84
      $region14: #{block_forward.5} parent=11 // pred_check_branch
        %169 = sbr.rel (%p167) target = $region16
      $region15: #{block_forward.5} parent=11 // pred_region
        _
      $region16: #{block_forward.5} parent=11 // pred_fallthru
        _
      // Predicated region
      $region17: #{block_forward.5} parent=11 // pred_check
        %p170 = pneg %p105
      $region18: #{block_forward.5} parent=11 // pred_check_branch
        %172 = sbr.rel (%p170) target = $region20
      $region19: #{block_forward.5} parent=11 // pred_region
        _
      $region20: #{block_forward.5} parent=11 // pred_fallthru
        _
      // Predicated region
      $region21: #{block_forward.5} parent=11 // pred_check
        %p173 = pneg %p126
      $region22: #{block_forward.5} parent=11 // pred_check_branch
        %175 = sbr.rel (%p173) target = $region24
      $region23: #{block_forward.5} parent=11 // pred_region
        _
      $region24: #{block_forward.5} parent=11 // pred_fallthru
        _
    $region12: #{block_forward.5} parent=5 // pred_fallthru
      _
    %p176 = scmp.lt.s32.totalorder %s11, 2
    // Predicated region
    $region25: #{block_forward.5} parent=5 // pred_check
      %p177 = pneg %p176
    $region26: #{block_forward.5} parent=5 // pred_check_branch
      %179 = sbr.rel (%p177) target = $region28
    $region27: #{block_forward.5} parent=5 // pred_region
      // Predicated region
      $region29: #{block_forward.5} parent=27 // pred_check
        %p180 = pneg %p31
      $region30: #{block_forward.5} parent=27 // pred_check_branch
        %182 = sbr.rel (%p180) target = $region32
      $region31: #{block_forward.5} parent=27 // pred_region
        %p183 = scmp.lt.s32.totalorder %s11, 1
        %s184 = scalar_select %p183, %s11, 1
        %s185 = smul.addr %s184, 8
        %s186 = smul.addr %s185, 4
        %s187 = scalar_lea.vmem %s0, %s186
      $region32: #{block_forward.5} parent=27 // pred_fallthru
        _
      // Predicated region
      $region33: #{block_forward.5} parent=27 // pred_check
        %p188 = pneg %p57
      $region34: #{block_forward.5} parent=27 // pred_check_branch
        %190 = sbr.rel (%p188) target = $region36
      $region35: #{block_forward.5} parent=27 // pred_region
        %p191 = scmp.lt.s32.totalorder %s11, 1
        %s192 = scalar_select %p191, %s11, 1
        %s193 = smul.addr %s192, 8
        %s194 = smul.addr %s193, 8
        %s195 = scalar_lea.vmem %s1, %s194
      $region36: #{block_forward.5} parent=27 // pred_fallthru
        _
    $region28: #{block_forward.5} parent=5 // pred_fallthru
      _
    %p196 = scmp.le.s32.totalorder 1, %s11
    %p197 = scmp.lt.s32.totalorder %s11, 3
    %p198 = pnand %p196, %p197
    %p199 = pneg %p198
    // Predicated region
    $region37: #{block_forward.5} parent=5 // pred_check
      _
    $region38: #{block_forward.5} parent=5 // pred_check_branch
      %201 = sbr.rel (%p198) target = $region40
    $region39: #{block_forward.5} parent=5 // pred_region
      %s202 = ssub.s32 %s11, 1
      %p203 = scmp.lt.s32.totalorder %s16, 1
      %s204 = scalar_select %p203, %s16, 1
      %s205 = smul.addr %s204, 8
      %s206 = smul.addr %s205, 4
      %s207 = scalar_lea.vmem %s0, %s206
      %p208 = pneg %p37
      %p209 = pneg %p34
      %p210 = scmp.lt.s32.totalorder %s16, 1
      %s211 = scalar_select %p210, %s16, 1
      %s212 = smul.addr %s211, 8
      %s213 = smul.addr %s212, 8
      %s214 = scalar_lea.vmem %s1, %s213
      %p215 = pneg %p63
      %p216 = pneg %p60
      %p217 = pneg %p84
      %p218 = pneg %p81
      %p219 = pneg %p105
      %p220 = pneg %p102
      %p221 = pneg %p126
      %p222 = pneg %p123
      %p223 = pneg %p152
      %p224 = pneg %p149
      %p225 = scmp.lt.s32.totalorder %s16, 1
      %s226 = scalar_select %p225, %s16, 1
      %s227 = smul.addr %s226, 8
      %s228 = smul.addr %s227, 8
      %s229 = scalar_lea.vmem %s5, %s228
      %p230 = scmp.lt.s32.totalorder %s16, 1
      %s231 = scalar_select %p230, %s16, 1
      %s232 = smul.addr %s231, 8
      %s233 = smul.addr %s232, 4
      %s234 = scalar_lea.vmem %s0, %s233
      %p235 = scmp.lt.s32.totalorder %s16, 1
      %s236 = scalar_select %p235, %s16, 1
      %s237 = smul.addr %s236, 8
      %s238 = smul.addr %s237, 8
      %s239 = scalar_lea.vmem %s1, %s238
      %p240 = scmp.lt.s32.totalorder %s16, 1
      %s241 = scalar_select %p240, %s16, 1
      %s242 = smul.addr %s241, 8
      %s243 = smul.addr %s242, 8
      %s244 = scalar_lea.vmem %s5, %s243
      %v245 = vld [vmem:[%s2] sm:$0xff]
      %v246 = vld [vmem:[%s2 + $0x8] sm:$0xff]
      %v247 = vld [vmem:[%s2 + $0x10] sm:$0xff]
      %v248 = vld [vmem:[%s2 + $0x18] sm:$0xff]
      %v249 = vld [vmem:[%s2 + $0x20] sm:$0xff]
      %v250 = vld [vmem:[%s2 + $0x28] sm:$0xff]
      %v251 = vld [vmem:[%s2 + $0x30] sm:$0xff]
      %v252 = vld [vmem:[%s2 + $0x38] sm:$0xff]
      %v253 = vld [vmem:[%s3] sm:$0xff]
      %v254 = vld [vmem:[%s3 + $0x8] sm:$0xff]
      %v255 = vld [vmem:[%s3 + $0x10] sm:$0xff]
      %v256 = vld [vmem:[%s3 + $0x18] sm:$0xff]
      %v257 = vld [vmem:[%s4] sm:$0xff]
      %v258 = vld [vmem:[%s4 + $0x8] sm:$0xff]
      %v259 = vld [vmem:[%s4 + $0x10] sm:$0xff]
      %v260 = vld [vmem:[%s4 + $0x18] sm:$0xff]
      %vm261 = vcmask 7168
      %v262 = vsel %vm261, %v245, 0.0
      %v263 = vsel %vm261, %v249, 0.0
      %v264 = vadd.f32 %v262, %v263
      %v265 = vsel %vm261, %v246, 0.0
      %v266 = vsel %vm261, %v250, 0.0
      %v267 = vadd.f32 %v265, %v266
      %v268 = vsel %vm261, %v247, 0.0
      %v269 = vsel %vm261, %v251, 0.0
      %v270 = vadd.f32 %v268, %v269
      %v271 = vsel %vm261, %v248, 0.0
      %v272 = vsel %vm261, %v252, 0.0
      %v273 = vadd.f32 %v271, %v272
      %vm274 = vcmask 15368
      %v275 = vsel %vm274, %v245, 0.0
      %v276 = vsel %vm274, %v249, 0.0
      %v277 = vadd.f32 %v275, %v276
      %v278 = vsel %vm274, %v246, 0.0
      %v279 = vsel %vm274, %v250, 0.0
      %v280 = vadd.f32 %v278, %v279
      %v281 = vsel %vm274, %v247, 0.0
      %v282 = vsel %vm274, %v251, 0.0
      %v283 = vadd.f32 %v281, %v282
      %v284 = vsel %vm274, %v248, 0.0
      %v285 = vsel %vm274, %v252, 0.0
      %v286 = vadd.f32 %v284, %v285
      %v287 = vmul.f32 %v264, 0.001953125
      %v288 = vmul.f32 %v267, 0.001953125
      %v289 = vmul.f32 %v270, 0.001953125
      %v290 = vmul.f32 %v273, 0.001953125
      %v291 = vmul.f32 %v277, 0.001953125
      %v292 = vmul.f32 %v280, 0.001953125
      %v293 = vmul.f32 %v283, 0.001953125
      %v294 = vmul.f32 %v286, 0.001953125
      %v295 = vmul.f32 %v287, %v287
      %v296 = vmul.f32 %v288, %v288
      %v297 = vmul.f32 %v289, %v289
      %v298 = vmul.f32 %v290, %v290
      %303 = vrot.lane.b32.xlu0 %v295, 1
      %v304 = vpop.permute.xlu0 %303
      %305 = vrot.lane.b32.xlu0 %v296, 1
      %v306 = vpop.permute.xlu0 %305
      %307 = vrot.lane.b32.xlu0 %v297, 1
      %v308 = vpop.permute.xlu0 %307
      %309 = vrot.lane.b32.xlu0 %v298, 1
      %v310 = vpop.permute.xlu0 %309
      %v315 = vsub.f32 %v291, %v304
      %v316 = vsub.f32 %v292, %v306
      %v317 = vsub.f32 %v293, %v308
      %v318 = vsub.f32 %v294, %v310
      %v319 = vmax.f32 %v315, 0.0
      %v320 = vmax.f32 %v316, 0.0
      %v321 = vmax.f32 %v317, 0.0
      %v322 = vmax.f32 %v318, 0.0
      %v323 = vadd.f32 %v319, 1e-05
      %v324 = vadd.f32 %v320, 1e-05
      %v325 = vadd.f32 %v321, 1e-05
      %v326 = vadd.f32 %v322, 1e-05
      %v327 = vrsqrt.pop %v323
      %v328 = vrsqrt.pop %v324
      %v329 = vrsqrt.pop %v325
      %v330 = vrsqrt.pop %v326
      %335 = vrot.lane.b32.xlu0 %v327, 127
      %v336 = vpop.permute.xlu0 %335
      %337 = vrot.lane.b32.xlu0 %v328, 127
      %v338 = vpop.permute.xlu0 %337
      %339 = vrot.lane.b32.xlu0 %v329, 127
      %v340 = vpop.permute.xlu0 %339
      %341 = vrot.lane.b32.xlu0 %v330, 127
      %v342 = vpop.permute.xlu0 %341
      %v347 = vmul.f32 %v253, %v336
      %v348 = vmul.f32 %v254, %v338
      %v349 = vmul.f32 %v255, %v340
      %v350 = vmul.f32 %v256, %v342
      %v351 = vmul.f32 %v287, %v347
      %v352 = vmul.f32 %v288, %v348
      %v353 = vmul.f32 %v289, %v349
      %v354 = vmul.f32 %v290, %v350
      %v355 = vsub.f32 %v257, %v351
      %v356 = vsub.f32 %v258, %v352
      %v357 = vsub.f32 %v259, %v353
      %v358 = vsub.f32 %v260, %v354
      %v359 = vld [vmem:[%s234] sm:$0xff]
      %v360 = vld [vmem:[%s234 + $0x8] sm:$0xff]
      %v361 = vld [vmem:[%s234 + $0x10] sm:$0xff]
      %v362 = vld [vmem:[%s234 + $0x18] sm:$0xff]
      %v363 = vunpack.c.l.bf16 %v359
      %v364 = vunpack.c.h.bf16 %v359
      %v365 = vunpack.c.l.bf16 %v360
      %v366 = vunpack.c.h.bf16 %v360
      %v367 = vunpack.c.l.bf16 %v361
      %v368 = vunpack.c.h.bf16 %v361
      %v369 = vunpack.c.l.bf16 %v362
      %v370 = vunpack.c.h.bf16 %v362
      %372 = vset.pattern.permute.xlu0 0
      %373 = vperm.xlu0 %372, %v347
      %v374 = vpop.permute.xlu0 %373
      %377 = vset.pattern.permute.xlu0 0
      %378 = vperm.xlu0 %377, %v348
      %v379 = vpop.permute.xlu0 %378
      %382 = vset.pattern.permute.xlu0 0
      %383 = vperm.xlu0 %382, %v349
      %v384 = vpop.permute.xlu0 %383
      %387 = vset.pattern.permute.xlu0 0
      %388 = vperm.xlu0 %387, %v350
      %v389 = vpop.permute.xlu0 %388
      %v391 = vmul.f32 %v363, %v374
      %v392 = vmul.f32 %v364, %v374
      %v393 = vmul.f32 %v365, %v379
      %v394 = vmul.f32 %v366, %v379
      %v395 = vmul.f32 %v367, %v384
      %v396 = vmul.f32 %v368, %v384
      %v397 = vmul.f32 %v369, %v389
      %v398 = vmul.f32 %v370, %v389
      %400 = vset.pattern.permute.xlu0 0
      %401 = vperm.xlu0 %400, %v355
      %v402 = vpop.permute.xlu0 %401
      %405 = vset.pattern.permute.xlu0 0
      %406 = vperm.xlu0 %405, %v356
      %v407 = vpop.permute.xlu0 %406
      %410 = vset.pattern.permute.xlu0 0
      %411 = vperm.xlu0 %410, %v357
      %v412 = vpop.permute.xlu0 %411
      %415 = vset.pattern.permute.xlu0 0
      %416 = vperm.xlu0 %415, %v358
      %v417 = vpop.permute.xlu0 %416
      %v419 = vadd.f32 %v391, %v402
      %v420 = vadd.f32 %v392, %v402
      %v421 = vadd.f32 %v393, %v407
      %v422 = vadd.f32 %v394, %v407
      %v423 = vadd.f32 %v395, %v412
      %v424 = vadd.f32 %v396, %v412
      %v425 = vadd.f32 %v397, %v417
      %v426 = vadd.f32 %v398, %v417
      %v427 = vld [vmem:[%s239] sm:$0xff]
      %v428 = vld [vmem:[%s239 + $0x8] sm:$0xff]
      %v429 = vld [vmem:[%s239 + $0x10] sm:$0xff]
      %v430 = vld [vmem:[%s239 + $0x18] sm:$0xff]
      %v431 = vld [vmem:[%s239 + $0x20] sm:$0xff]
      %v432 = vld [vmem:[%s239 + $0x28] sm:$0xff]
      %v433 = vld [vmem:[%s239 + $0x30] sm:$0xff]
      %v434 = vld [vmem:[%s239 + $0x38] sm:$0xff]
      %v435 = vadd.f32 %v419, %v427
      %v436 = vadd.f32 %v420, %v428
      %v437 = vadd.f32 %v421, %v429
      %v438 = vadd.f32 %v422, %v430
      %v439 = vadd.f32 %v423, %v431
      %v440 = vadd.f32 %v424, %v432
      %v441 = vadd.f32 %v425, %v433
      %v442 = vadd.f32 %v426, %v434
      %v443 = vmax.f32 %v435, 0.0
      %v444 = vmax.f32 %v436, 0.0
      %v445 = vmax.f32 %v437, 0.0
      %v446 = vmax.f32 %v438, 0.0
      %v447 = vmax.f32 %v439, 0.0
      %v448 = vmax.f32 %v440, 0.0
      %v449 = vmax.f32 %v441, 0.0
      %v450 = vmax.f32 %v442, 0.0
      %451 = vst [vmem:[%s244] sm:$0xff] %v443
      %452 = vst [vmem:[%s244 + $0x8] sm:$0xff] %v444
      %453 = vst [vmem:[%s244 + $0x10] sm:$0xff] %v445
      %454 = vst [vmem:[%s244 + $0x18] sm:$0xff] %v446
      %455 = vst [vmem:[%s244 + $0x20] sm:$0xff] %v447
      %456 = vst [vmem:[%s244 + $0x28] sm:$0xff] %v448
      %457 = vst [vmem:[%s244 + $0x30] sm:$0xff] %v449
      %458 = vst [vmem:[%s244 + $0x38] sm:$0xff] %v450
      %p459 = scmp.lt.s32.totalorder %s16, 1
      %s460 = scalar_select %p459, %s16, 1
      %s461 = smul.addr %s460, 8
      %s462 = smul.addr %s461, 8
      %s463 = scalar_lea.vmem %s5, %s462
      // Predicated region
      $region41: #{block_forward.5} parent=39 // pred_check
        %p464 = pneg %p149
      $region42: #{block_forward.5} parent=39 // pred_check_branch
        %466 = sbr.rel (%p464) target = $region44
      $region43: #{block_forward.5} parent=39 // pred_region
        _
      $region44: #{block_forward.5} parent=39 // pred_fallthru
        _
    $region40: #{block_forward.5} parent=5 // pred_fallthru
      _
    %p467 = scmp.le.s32.totalorder 2, %s11
    // Predicated region
    $region45: #{block_forward.5} parent=5 // pred_check
      %p468 = pneg %p467
    $region46: #{block_forward.5} parent=5 // pred_check_branch
      %470 = sbr.rel (%p468) target = $region48
    $region47: #{block_forward.5} parent=5 // pred_region
      %s471 = ssub.s32 %s11, 2
      // Predicated region
      $region49: #{block_forward.5} parent=47 // pred_check
        %p472 = pneg %p155
      $region50: #{block_forward.5} parent=47 // pred_check_branch
        %474 = sbr.rel (%p472) target = $region52
      $region51: #{block_forward.5} parent=47 // pred_region
        %p475 = scmp.lt.s32.totalorder %s17, 1
        %s476 = scalar_select %p475, %s17, 1
        %s477 = smul.addr %s476, 8
        %s478 = smul.addr %s477, 8
        %s479 = scalar_lea.vmem %s5, %s478
      $region52: #{block_forward.5} parent=47 // pred_fallthru
        _
    $region48: #{block_forward.5} parent=5 // pred_fallthru
      _
  $region6: #{block_forward.5} parent=0 // loop_footer
    %s15 = sadd.s32 1, %s11
  $region7: #{block_forward.5} parent=0 // loop_footer_branch
    %10 = sbr.rel target = $region3
  $region8: #{block_forward.5} parent=0 // loop_exit
    _

// kernel: block_forward.3
$region0: #{block_forward.3}
  #allocation0 [shape = 'u32[]', space=smem, size = 0x4, offset = 0x4, fixed_abs, tag = 'smem constant byte address 0x4 - core index']
  #allocation1 [shape = 'u32[144,128]{1,0:T(1,128)}', space=vmem, size = 0x12000, scoped, tag = 'internal scratch']
  #allocation2 [shape = 'bf16[32,512]{1,0:T(16,128)(2,1)}', space=vmem, size = 0x8000, scoped, tag = 'scratch operand']
  %s0 = inlined_call_operand.vmem [shape: f32[2,32,256], index: 0, kind: input, shape index: {}]
  %s1 = inlined_call_operand.vmem [shape: bf16[32,288], index: 1, kind: input, shape index: {}]
  %s2 = inlined_call_operand.vmem [shape: bf16[2,256], index: 2, kind: input, shape index: {}]
  %s3 = inlined_call_operand.vmem [shape: bf16[2,32,256], index: 3, kind: output, shape index: {0}]
  %s4 = inlined_call_operand.vmem [shape: f32[2,32,2], index: 4, kind: output, shape index: {1}]
  %5 = xla_tuple %s3, %s4
  %s6 = sld [smem:[#allocation0]]
  $region53: #{block_forward.3} parent=0
    _
  %s8 = ssub.s32 1, %s6
  %s9 = scalar_select 0, %s8, %s6
  loop: start=0, step=1, limit=4
  $region2: #{block_forward.3} parent=0 // loop_pre_header
    _
  $region3: #{block_forward.3} parent=0 // loop_header
    %s11 = sphi 0, %s15
    %p12 = scmp.ge.s32.totalorder %s11, 4
    %s21 = sphi 0, %s23
    %s24 = sphi 0, %s21
    %s25 = sphi 0, %s24
    %s41 = sphi 0, %s25
    %s45 = sphi 0, %s45
    %s47 = sphi 0, %s45
    %s48 = sphi 0, %s47
    %s62 = sphi 0, %s48
    %s66 = sphi 0, %s66
    %s68 = sphi 0, %s66
    %s69 = sphi 0, %s68
    %s83 = sphi 0, %s69
    %s89 = sphi 0, %s91
    %s92 = sphi 0, %s89
    %s93 = sphi 0, %s92
    %s109 = sphi 0, %s93
    %s115 = sphi 0, %s117
    %s118 = sphi 0, %s115
    %s119 = sphi 0, %s118
    %s135 = sphi 0, %s119
  $region4: #{block_forward.3} parent=0 // loop_header_branch
    %14 = sbr.rel (%p12) target = $region8
  $region5: #{block_forward.3} parent=0 // loop_body
    %s16 = ssub.s32 %s11, 1
    %s17 = ssub.s32 %s11, 2
    %s18 = sadd.s32 %s11, 1
    %s19 = ssub.s32 %s11, %s18
    %p20 = scmp.eq.s32.totalorder %s19, 0
    %s22 = sadd.s32 %s21, 1
    %s23 = scalar_select %p20, %s21, %s22
    %p26 = pneg %p20
    %p27 = scmp.eq.s32.totalorder %s11, 1
    %p28 = por %p26, %p27
    %p29 = scmp.ne.s32.totalorder %s21, %s24
    %p30 = scmp.eq.s32.totalorder %s11, 0
    %p31 = por %p29, %p30
    %p32 = scmp.ne.s32.totalorder %s21, %s24
    %p33 = scmp.eq.s32.totalorder %s16, 1
    %p34 = por %p32, %p33
    %p35 = scmp.ne.s32.totalorder %s24, %s25
    %p36 = scmp.eq.s32.totalorder %s16, 0
    %p37 = por %p35, %p36
    %p38 = scmp.ne.s32.totalorder %s24, %s25
    %p39 = scmp.eq.s32.totalorder %s17, 1
    %p40 = por %p38, %p39
    %p42 = scmp.ne.s32.totalorder %s25, %s41
    %p43 = scmp.eq.s32.totalorder %s17, 0
    %p44 = por %p42, %p43
    %s46 = sadd.s32 %s45, 1
    %p49 = scmp.eq.s32.totalorder %s11, 1
    %p50 = scmp.ne.s32.totalorder %s45, %s47
    %p51 = scmp.eq.s32.totalorder %s11, 0
    %p52 = por %p50, %p51
    %p53 = scmp.ne.s32.totalorder %s45, %s47
    %p54 = scmp.eq.s32.totalorder %s16, 1
    %p55 = por %p53, %p54
    %p56 = scmp.ne.s32.totalorder %s47, %s48
    %p57 = scmp.eq.s32.totalorder %s16, 0
    %p58 = por %p56, %p57
    %p59 = scmp.ne.s32.totalorder %s47, %s48
    %p60 = scmp.eq.s32.totalorder %s17, 1
    %p61 = por %p59, %p60
    %p63 = scmp.ne.s32.totalorder %s48, %s62
    %p64 = scmp.eq.s32.totalorder %s17, 0
    %p65 = por %p63, %p64
    %s67 = sadd.s32 %s66, 1
    %p70 = scmp.eq.s32.totalorder %s11, 1
    %p71 = scmp.ne.s32.totalorder %s66, %s68
    %p72 = scmp.eq.s32.totalorder %s11, 0
    %p73 = por %p71, %p72
    %p74 = scmp.ne.s32.totalorder %s66, %s68
    %p75 = scmp.eq.s32.totalorder %s16, 1
    %p76 = por %p74, %p75
    %p77 = scmp.ne.s32.totalorder %s68, %s69
    %p78 = scmp.eq.s32.totalorder %s16, 0
    %p79 = por %p77, %p78
    %p80 = scmp.ne.s32.totalorder %s68, %s69
    %p81 = scmp.eq.s32.totalorder %s17, 1
    %p82 = por %p80, %p81
    %p84 = scmp.ne.s32.totalorder %s69, %s83
    %p85 = scmp.eq.s32.totalorder %s17, 0
    %p86 = por %p84, %p85
    %s87 = ssub.s32 %s11, %s18
    %p88 = scmp.eq.s32.totalorder %s87, 0
    %s90 = sadd.s32 %s89, 1
    %s91 = scalar_select %p88, %s89, %s90
    %p94 = pneg %p88
    %p95 = scmp.eq.s32.totalorder %s11, 1
    %p96 = por %p94, %p95
    %p97 = scmp.ne.s32.totalorder %s89, %s92
    %p98 = scmp.eq.s32.totalorder %s11, 0
    %p99 = por %p97, %p98
    %p100 = scmp.ne.s32.totalorder %s89, %s92
    %p101 = scmp.eq.s32.totalorder %s16, 1
    %p102 = por %p100, %p101
    %p103 = scmp.ne.s32.totalorder %s92, %s93
    %p104 = scmp.eq.s32.totalorder %s16, 0
    %p105 = por %p103, %p104
    %p106 = scmp.ne.s32.totalorder %s92, %s93
    %p107 = scmp.eq.s32.totalorder %s17, 1
    %p108 = por %p106, %p107
    %p110 = scmp.ne.s32.totalorder %s93, %s109
    %p111 = scmp.eq.s32.totalorder %s17, 0
    %p112 = por %p110, %p111
    %s113 = ssub.s32 %s11, %s18
    %p114 = scmp.eq.s32.totalorder %s113, 0
    %s116 = sadd.s32 %s115, 1
    %s117 = scalar_select %p114, %s115, %s116
    %p120 = pneg %p114
    %p121 = scmp.eq.s32.totalorder %s11, 1
    %p122 = por %p120, %p121
    %p123 = scmp.ne.s32.totalorder %s115, %s118
    %p124 = scmp.eq.s32.totalorder %s11, 0
    %p125 = por %p123, %p124
    %p126 = scmp.ne.s32.totalorder %s115, %s118
    %p127 = scmp.eq.s32.totalorder %s16, 1
    %p128 = por %p126, %p127
    %p129 = scmp.ne.s32.totalorder %s118, %s119
    %p130 = scmp.eq.s32.totalorder %s16, 0
    %p131 = por %p129, %p130
    %p132 = scmp.ne.s32.totalorder %s118, %s119
    %p133 = scmp.eq.s32.totalorder %s17, 1
    %p134 = por %p132, %p133
    %p136 = scmp.ne.s32.totalorder %s119, %s135
    %p137 = scmp.eq.s32.totalorder %s17, 0
    %p138 = por %p136, %p137
    %p139 = scmp.le.s32.totalorder 1, %s11
    %p140 = scmp.lt.s32.totalorder %s11, 3
    %p141 = pnand %p139, %p140
    %p142 = pneg %p141
    // Predicated region
    $region9: #{block_forward.3} parent=5 // pred_check
      _
    $region10: #{block_forward.3} parent=5 // pred_check_branch
      %144 = sbr.rel (%p141) target = $region12
    $region11: #{block_forward.3} parent=5 // pred_region
      %s145 = ssub.s32 %s11, 1
      // Predicated region
      $region13: #{block_forward.3} parent=11 // pred_check
        %p146 = pneg %p58
      $region14: #{block_forward.3} parent=11 // pred_check_branch
        %148 = sbr.rel (%p146) target = $region16
      $region15: #{block_forward.3} parent=11 // pred_region
        _
      $region16: #{block_forward.3} parent=11 // pred_fallthru
        _
      // Predicated region
      $region17: #{block_forward.3} parent=11 // pred_check
        %p149 = pneg %p79
      $region18: #{block_forward.3} parent=11 // pred_check_branch
        %151 = sbr.rel (%p149) target = $region20
      $region19: #{block_forward.3} parent=11 // pred_region
        _
      $region20: #{block_forward.3} parent=11 // pred_fallthru
        _
    $region12: #{block_forward.3} parent=5 // pred_fallthru
      _
    %p152 = scmp.lt.s32.totalorder %s11, 2
    // Predicated region
    $region21: #{block_forward.3} parent=5 // pred_check
      %p153 = pneg %p152
    $region22: #{block_forward.3} parent=5 // pred_check_branch
      %155 = sbr.rel (%p153) target = $region24
    $region23: #{block_forward.3} parent=5 // pred_region
      // Predicated region
      $region25: #{block_forward.3} parent=23 // pred_check
        %p156 = pneg %p31
      $region26: #{block_forward.3} parent=23 // pred_check_branch
        %158 = sbr.rel (%p156) target = $region28
      $region27: #{block_forward.3} parent=23 // pred_region
        %p159 = scmp.lt.s32.totalorder %s11, 1
        %s160 = scalar_select %p159, %s11, 1
        %s161 = smul.addr %s160, 8
        %s162 = smul.addr %s161, 8
        %s163 = scalar_lea.vmem %s0, %s162
      $region28: #{block_forward.3} parent=23 // pred_fallthru
        _
    $region24: #{block_forward.3} parent=5 // pred_fallthru
      _
    %p164 = scmp.le.s32.totalorder 1, %s11
    %p165 = scmp.lt.s32.totalorder %s11, 3
    %p166 = pnand %p164, %p165
    %p167 = pneg %p166
    // Predicated region
    $region29: #{block_forward.3} parent=5 // pred_check
      _
    $region30: #{block_forward.3} parent=5 // pred_check_branch
      %169 = sbr.rel (%p166) target = $region32
    $region31: #{block_forward.3} parent=5 // pred_region
      %s170 = ssub.s32 %s11, 1
      %p171 = scmp.lt.s32.totalorder %s16, 1
      %s172 = scalar_select %p171, %s16, 1
      %s173 = smul.addr %s172, 8
      %s174 = smul.addr %s173, 8
      %s175 = scalar_lea.vmem %s0, %s174
      %p176 = pneg %p37
      %p177 = pneg %p34
      %p178 = pneg %p58
      %p179 = pneg %p55
      %p180 = pneg %p79
      %p181 = pneg %p76
      %p182 = pneg %p105
      %p183 = pneg %p102
      %p184 = scmp.lt.s32.totalorder %s16, 1
      %s185 = scalar_select %p184, %s16, 1
      %s186 = smul.addr %s185, 8
      %s187 = smul.addr %s186, 4
      %s188 = scalar_lea.vmem %s3, %s187
      %p189 = pneg %p131
      %p190 = pneg %p128
      %p191 = scmp.lt.s32.totalorder %s16, 1
      %s192 = scalar_select %p191, %s16, 1
      %s193 = smul.addr %s192, 4
      %s194 = smul.addr %s193, 8
      %s195 = scalar_lea.vmem %s4, %s194
      %p196 = scmp.lt.s32.totalorder %s16, 1
      %s197 = scalar_select %p196, %s16, 1
      %s198 = smul.addr %s197, 8
      %s199 = smul.addr %s198, 8
      %s200 = scalar_lea.vmem %s0, %s199
      %p201 = scmp.lt.s32.totalorder %s16, 1
      %s202 = scalar_select %p201, %s16, 1
      %s203 = smul.addr %s202, 8
      %s204 = smul.addr %s203, 4
      %s205 = scalar_lea.vmem %s3, %s204
      %p206 = scmp.lt.s32.totalorder %s16, 1
      %s207 = scalar_select %p206, %s16, 1
      %s208 = smul.addr %s207, 4
      %s209 = smul.addr %s208, 8
      %s210 = scalar_lea.vmem %s4, %s209
      %v212 = vld [vmem:[%s200] sm:$0xff]
      %v213 = vld [vmem:[%s200 + $0x8] sm:$0xff]
      %v214 = vld [vmem:[%s200 + $0x10] sm:$0xff]
      %v215 = vld [vmem:[%s200 + $0x18] sm:$0xff]
      %v216 = vld [vmem:[%s200 + $0x20] sm:$0xff]
      %v217 = vld [vmem:[%s200 + $0x28] sm:$0xff]
      %v218 = vld [vmem:[%s200 + $0x30] sm:$0xff]
      %v219 = vld [vmem:[%s200 + $0x38] sm:$0xff]
      %220 = vst [vmem:[#allocation2] sm:$0xff] 0
      %221 = vst [vmem:[#allocation2 + $0x20] sm:$0xff] 0
      %222 = vst [vmem:[#allocation2 + $0x18] sm:$0xff] 0
      %223 = vst [vmem:[#allocation2 + $0x38] sm:$0xff] 0
      %v224 = vpack.c.bf16 %v214, %v212
      %v225 = vpack.c.bf16 %v215, %v213
      %v226 = vpack.c.bf16 %v218, %v216
      %v227 = vpack.c.bf16 %v219, %v217
      %228 = vst [vmem:[#allocation2 + $0x8] sm:$0xff] %v224
      %229 = vst [vmem:[#allocation2 + $0x10] sm:$0xff] %v225
      %230 = vst [vmem:[#allocation2 + $0x28] sm:$0xff] %v226
      %231 = vst [vmem:[#allocation2 + $0x30] sm:$0xff] %v227
      %v232 = vld [vmem:[%s2] sm:$0x3]
      %v233 = vld [vmem:[#allocation2] sm:$0xff]
      %v234 = vld [vmem:[#allocation2 + $0x8] sm:$0xff]
      %v235 = vld [vmem:[#allocation2 + $0x10] sm:$0xff]
      %v236 = vld [vmem:[#allocation2 + $0x20] sm:$0xff]
      %v237 = vld [vmem:[#allocation2 + $0x28] sm:$0xff]
      %v238 = vld [vmem:[#allocation2 + $0x30] sm:$0xff]
      %v241 = vunpack.c.l.s4 1966171168
      %v242 = vunpack.c.0.s8 %v241
      %v243 = vlaneseq
      %v244 = vshrl.u32 %v243, 7
      %v245 = vsub.s32 %v242, %v244
      %v246 = vrot.slane %v232, %v245
      %v247 = vcombine.high %v246, %v246
      %v249 = vunpack.c.l.s4 1966171168
      %v250 = vunpack.c.0.s8 %v249
      %v251 = vlaneseq
      %v252 = vshrl.u32 %v251, 7
      %v253 = vsub.s32 %v250, %v252
      %v254 = vrot.slane %v246, %v253
      %v256 = vunpack.c.l.s4 1966171168
      %v257 = vunpack.c.0.s8 %v256
      %v258 = vlaneseq
      %v259 = vshrl.u32 %v258, 7
      %v260 = vsub.s32 %v257, %v259
      %v261 = vrot.slane %v247, %v260
      %v263 = vpack.i.b16 %v254, %v254
      %v265 = vlaneseq
      %v266 = vshrl.u32 %v265, 7
      %v267 = vsub.s32 0, %v266
      %v268 = vrot.slane %v263, %v267
      %v270 = vpack.i.b16 %v261, %v261
      %v272 = vlaneseq
      %v273 = vshrl.u32 %v272, 7
      %v274 = vsub.s32 0, %v273
      %v275 = vrot.slane %v270, %v274
      %278 = vrot.lane.b32.xlu0 %v268, 111
      %v279 = vpop.permute.xlu0 %278
      %280 = vrot.lane.b32.xlu0 %v275, 111
      %v281 = vpop.permute.xlu0 %280
      %vm282 = vcmask 908288
      %v283 = vsel %vm282, %v279, %v281
      %v287 = vmul.bf16 %v233, %v279
      %v288 = vmul.bf16 %v234, %v283
      %v289 = vmul.bf16 %v235, %v281
      %v290 = vmul.bf16 %v236, %v279
      %v291 = vmul.bf16 %v237, %v283
      %v292 = vmul.bf16 %v238, %v281
      %v293 = vshrl.u32 %v254, 16
      %v294 = vpack.i.b16 %v293, %v293
      %v296 = vlaneseq
      %v297 = vshrl.u32 %v296, 7
      %v298 = vsub.s32 0, %v297
      %v299 = vrot.slane %v294, %v298
      %v300 = vshrl.u32 %v261, 16
      %v301 = vpack.i.b16 %v300, %v300
      %v303 = vlaneseq
      %v304 = vshrl.u32 %v303, 7
      %v305 = vsub.s32 0, %v304
      %v306 = vrot.slane %v301, %v305
      %309 = vrot.lane.b32.xlu0 %v299, 113
      %v310 = vpop.permute.xlu0 %309
      %311 = vrot.lane.b32.xlu0 %v306, 113
      %v312 = vpop.permute.xlu0 %311
      %vm313 = vcmask 924672
      %v314 = vsel %vm313, %v310, %v312
      %v318 = vmul.bf16 %v233, %v310
      %v319 = vmul.bf16 %v234, %v314
      %v320 = vmul.bf16 %v235, %v312
      %v321 = vmul.bf16 %v236, %v310
      %v322 = vmul.bf16 %v237, %v314
      %v323 = vmul.bf16 %v238, %v312
      %324 = vrot.lane.b32.xlu0 %v268, 127
      %v325 = vpop.permute.xlu0 %324
      %326 = vrot.lane.b32.xlu0 %v275, 127
      %v327 = vpop.permute.xlu0 %326
      %vm328 = vcmask 1039360
      %v329 = vsel %vm328, %v325, %v327
      %v333 = vmul.bf16 %v233, %v325
      %v334 = vmul.bf16 %v234, %v329
      %v335 = vmul.bf16 %v235, %v327
      %v336 = vmul.bf16 %v236, %v325
      %v337 = vmul.bf16 %v237, %v329
      %v338 = vmul.bf16 %v238, %v327
      %v339 = vld [vmem:[#allocation2 + $0x8] sm:$0xff]
      %v340 = vld [vmem:[#allocation2 + $0x10] sm:$0xff]
      %v341 = vld [vmem:[#allocation2 + $0x18] sm:$0xff]
      %v342 = vld [vmem:[#allocation2 + $0x28] sm:$0xff]
      %v343 = vld [vmem:[#allocation2 + $0x30] sm:$0xff]
      %v344 = vld [vmem:[#allocation2 + $0x38] sm:$0xff]
      %345 = vrot.lane.b32.xlu0 %v299, 1
      %v346 = vpop.permute.xlu0 %345
      %347 = vrot.lane.b32.xlu0 %v306, 1
      %v348 = vpop.permute.xlu0 %347
      %vm349 = vcmask 7168
      %v350 = vsel %vm349, %v346, %v348
      %v354 = vmul.bf16 %v339, %v346
      %v355 = vmul.bf16 %v340, %v350
      %v356 = vmul.bf16 %v341, %v348
      %v357 = vmul.bf16 %v342, %v346
      %v358 = vmul.bf16 %v343, %v350
      %v359 = vmul.bf16 %v344, %v348
      %360 = vrot.lane.b32.xlu0 %v268, 15
      %v361 = vpop.permute.xlu0 %360
      %362 = vrot.lane.b32.xlu0 %v275, 15
      %v363 = vpop.permute.xlu0 %362
      %vm364 = vcmask 121856
      %v365 = vsel %vm364, %v361, %v363
      %v369 = vmul.bf16 %v339, %v361
      %v370 = vmul.bf16 %v340, %v365
      %v371 = vmul.bf16 %v341, %v363
      %v372 = vmul.bf16 %v342, %v361
      %v373 = vmul.bf16 %v343, %v365
      %v374 = vmul.bf16 %v344, %v363
      %375 = vrot.lane.b32.xlu0 %v299, 17
      %v376 = vpop.permute.xlu0 %375
      %377 = vrot.lane.b32.xlu0 %v306, 17
      %v378 = vpop.permute.xlu0 %377
      %vm379 = vcmask 138240
      %v380 = vsel %vm379, %v376, %v378
      %v384 = vmul.bf16 %v339, %v376
      %v385 = vmul.bf16 %v340, %v380
      %v386 = vmul.bf16 %v341, %v378
      %v387 = vmul.bf16 %v342, %v376
      %v388 = vmul.bf16 %v343, %v380
      %v389 = vmul.bf16 %v344, %v378
      %396 = vrot.lane.b32.xlu0 %v233, 127
      %v397 = vpop.permute.xlu0 %396
      %398 = vrot.lane.b32.xlu0 %v234, 127
      %v399 = vpop.permute.xlu0 %398
      %400 = vrot.lane.b32.xlu0 %v235, 127
      %v401 = vpop.permute.xlu0 %400
      %402 = vrot.lane.b32.xlu0 %v236, 127
      %v403 = vpop.permute.xlu0 %402
      %404 = vrot.lane.b32.xlu0 %v237, 127
      %v405 = vpop.permute.xlu0 %404
      %406 = vrot.lane.b32.xlu0 %v238, 127
      %v407 = vpop.permute.xlu0 %406
      %v408 = vsel %vm328, %v397, %v399
      %v409 = vsel %vm328, %v399, %v401
      %v410 = vsel %vm328, %v403, %v405
      %v411 = vsel %vm328, %v405, %v407
      %418 = vrot.lane.b32.xlu0 %v318, 126
      %v419 = vpop.permute.xlu0 %418
      %420 = vrot.lane.b32.xlu0 %v319, 126
      %v421 = vpop.permute.xlu0 %420
      %422 = vrot.lane.b32.xlu0 %v320, 126
      %v423 = vpop.permute.xlu0 %422
      %424 = vrot.lane.b32.xlu0 %v321, 126
      %v425 = vpop.permute.xlu0 %424
      %426 = vrot.lane.b32.xlu0 %v322, 126
      %v427 = vpop.permute.xlu0 %426
      %428 = vrot.lane.b32.xlu0 %v323, 126
      %v429 = vpop.permute.xlu0 %428
      %vm430 = vcmask 1031168
      %v431 = vsel %vm430, %v419, %v421
      %v432 = vsel %vm430, %v421, %v423
      %v433 = vsel %vm430, %v425, %v427
      %v434 = vsel %vm430, %v427, %v429
      %441 = vrot.lane.b32.xlu0 %v333, 112
      %v442 = vpop.permute.xlu0 %441
      %443 = vrot.lane.b32.xlu0 %v334, 112
      %v444 = vpop.permute.xlu0 %443
      %445 = vrot.lane.b32.xlu0 %v335, 112
      %v446 = vpop.permute.xlu0 %445
      %447 = vrot.lane.b32.xlu0 %v336, 112
      %v448 = vpop.permute.xlu0 %447
      %449 = vrot.lane.b32.xlu0 %v337, 112
      %v450 = vpop.permute.xlu0 %449
      %451 = vrot.lane.b32.xlu0 %v338, 112
      %v452 = vpop.permute.xlu0 %451
      %vm453 = vcmask 916480
      %v454 = vsel %vm453, %v442, %v444
      %v455 = vsel %vm453, %v444, %v446
      %v456 = vsel %vm453, %v448, %v450
      %v457 = vsel %vm453, %v450, %v452
      %458 = vrot.lane.b32.xlu0 %v234, 111
      %v459 = vpop.permute.xlu0 %458
      %460 = vrot.lane.b32.xlu0 %v235, 111
      %v461 = vpop.permute.xlu0 %460
      %462 = vrot.lane.b32.xlu0 %v237, 111
      %v463 = vpop.permute.xlu0 %462
      %464 = vrot.lane.b32.xlu0 %v238, 111
      %v465 = vpop.permute.xlu0 %464
      %v466 = vsel %vm282, %v459, %v461
      %v467 = vsel %vm282, %v463, %v465
      %474 = vrot.lane.b32.xlu0 %v354, 110
      %v475 = vpop.permute.xlu0 %474
      %476 = vrot.lane.b32.xlu0 %v355, 110
      %v477 = vpop.permute.xlu0 %476
      %478 = vrot.lane.b32.xlu0 %v356, 110
      %v479 = vpop.permute.xlu0 %478
      %480 = vrot.lane.b32.xlu0 %v357, 110
      %v481 = vpop.permute.xlu0 %480
      %482 = vrot.lane.b32.xlu0 %v358, 110
      %v483 = vpop.permute.xlu0 %482
      %484 = vrot.lane.b32.xlu0 %v359, 110
      %v485 = vpop.permute.xlu0 %484
      %vm486 = vcmask 900096
      %v487 = vsel %vm486, %v475, %v477
      %v488 = vsel %vm486, %v477, %v479
      %v489 = vsel %vm486, %v481, %v483
      %v490 = vsel %vm486, %v483, %v485
      %497 = vrot.lane.b32.xlu0 %v369, 96
      %v498 = vpop.permute.xlu0 %497
      %499 = vrot.lane.b32.xlu0 %v370, 96
      %v500 = vpop.permute.xlu0 %499
      %501 = vrot.lane.b32.xlu0 %v371, 96
      %v502 = vpop.permute.xlu0 %501
      %503 = vrot.lane.b32.xlu0 %v372, 96
      %v504 = vpop.permute.xlu0 %503
      %505 = vrot.lane.b32.xlu0 %v373, 96
      %v506 = vpop.permute.xlu0 %505
      %507 = vrot.lane.b32.xlu0 %v374, 96
      %v508 = vpop.permute.xlu0 %507
      %vm509 = vcmask 785408
      %v510 = vsel %vm509, %v498, %v500
      %v511 = vsel %vm509, %v500, %v502
      %v512 = vsel %vm509, %v504, %v506
      %v513 = vsel %vm509, %v506, %v508
      %520 = vrot.lane.b32.xlu0 %v339, 95
      %v521 = vpop.permute.xlu0 %520
      %522 = vrot.lane.b32.xlu0 %v340, 95
      %v523 = vpop.permute.xlu0 %522
      %524 = vrot.lane.b32.xlu0 %v341, 95
      %v525 = vpop.permute.xlu0 %524
      %526 = vrot.lane.b32.xlu0 %v342, 95
      %v527 = vpop.permute.xlu0 %526
      %528 = vrot.lane.b32.xlu0 %v343, 95
      %v529 = vpop.permute.xlu0 %528
      %530 = vrot.lane.b32.xlu0 %v344, 95
      %v531 = vpop.permute.xlu0 %530
      %vm532 = vcmask 777216
      %v533 = vsel %vm532, %v521, %v523
      %v534 = vsel %vm532, %v523, %v525
      %v535 = vsel %vm532, %v527, %v529
      %v536 = vsel %vm532, %v529, %v531
      %543 = vrot.lane.b32.xlu0 %v384, 94
      %v544 = vpop.permute.xlu0 %543
      %545 = vrot.lane.b32.xlu0 %v385, 94
      %v546 = vpop.permute.xlu0 %545
      %547 = vrot.lane.b32.xlu0 %v386, 94
      %v548 = vpop.permute.xlu0 %547
      %549 = vrot.lane.b32.xlu0 %v387, 94
      %v550 = vpop.permute.xlu0 %549
      %551 = vrot.lane.b32.xlu0 %v388, 94
      %v552 = vpop.permute.xlu0 %551
      %553 = vrot.lane.b32.xlu0 %v389, 94
      %v554 = vpop.permute.xlu0 %553
      %vm555 = vcmask 769024
      %v556 = vsel %vm555, %v544, %v546
      %v557 = vsel %vm555, %v546, %v548
      %v558 = vsel %vm555, %v550, %v552
      %v559 = vsel %vm555, %v552, %v554
      %v560 = vld [vmem:[%s1] sm:$0xff]
      %v561 = vld [vmem:[%s1 + $0x8] sm:$0xf]
      %v562 = vld [vmem:[%s1 + $0xc] sm:$0xff]
      %v563 = vld [vmem:[%s1 + $0x14] sm:$0xf]
      %v564 = vld [vmem:[%s1 + $0x18] sm:$0xff]
      %v565 = vld [vmem:[%s1 + $0x20] sm:$0xf]
      %v566 = vld [vmem:[%s1 + $0x24] sm:$0xff]
      %v567 = vld [vmem:[%s1 + $0x2c] sm:$0xf]
      %v576 = vunpack.c.l.b16 %v560
      %v577 = vunpack.c.h.b16 %v560
      %v578 = vunpack.c.l.b16 %v561
      %v579 = vunpack.c.l.b16 %v562
      %v580 = vunpack.c.h.b16 %v562
      %v581 = vunpack.c.l.b16 %v563
      %v582 = vunpack.c.l.b16 %v564
      %v583 = vunpack.c.h.b16 %v564
      %v584 = vunpack.c.l.b16 %v565
      %v585 = vunpack.c.l.b16 %v566
      %v586 = vunpack.c.h.b16 %v566
      %v587 = vunpack.c.l.b16 %v567
      %v588 = vpack.c.b16 %v579, %v576
      %v589 = vpack.c.b16 %v580, %v577
      %v590 = vpack.c.b16 %v581, %v578
      %v591 = vpack.c.b16 %v585, %v582
      %v592 = vpack.c.b16 %v586, %v583
      %v593 = vpack.c.b16 %v587, %v584
      %604 = vrot.lane.b32.xlu0 %v287, 17
      %v605 = vpop.permute.xlu0 %604
      %606 = vrot.lane.b32.xlu0 %v288, 17
      %v607 = vpop.permute.xlu0 %606
      %608 = vrot.lane.b32.xlu0 %v289, 17
      %v609 = vpop.permute.xlu0 %608
      %610 = vrot.lane.b32.xlu0 %v290, 17
      %v611 = vpop.permute.xlu0 %610
      %612 = vrot.lane.b32.xlu0 %v291, 17
      %v613 = vpop.permute.xlu0 %612
      %614 = vrot.lane.b32.xlu0 %v292, 17
      %v615 = vpop.permute.xlu0 %614
      %616 = vrot.lane.b32.xlu0 %v408, 17
      %v617 = vpop.permute.xlu0 %616
      %618 = vrot.lane.b32.xlu0 %v409, 17
      %v619 = vpop.permute.xlu0 %618
      %620 = vrot.lane.b32.xlu0 %v401, 17
      %v621 = vpop.permute.xlu0 %620
      %622 = vrot.lane.b32.xlu0 %v410, 17
      %v623 = vpop.permute.xlu0 %622
      %624 = vrot.lane.b32.xlu0 %v411, 17
      %v625 = vpop.permute.xlu0 %624
      %626 = vrot.lane.b32.xlu0 %v407, 17
      %v627 = vpop.permute.xlu0 %626
      %628 = vrot.lane.b32.xlu0 %v431, 17
      %v629 = vpop.permute.xlu0 %628
      %630 = vrot.lane.b32.xlu0 %v432, 17
      %v631 = vpop.permute.xlu0 %630
      %632 = vrot.lane.b32.xlu0 %v423, 17
      %v633 = vpop.permute.xlu0 %632
      %634 = vrot.lane.b32.xlu0 %v433, 17
      %v635 = vpop.permute.xlu0 %634
      %636 = vrot.lane.b32.xlu0 %v434, 17
      %v637 = vpop.permute.xlu0 %636
      %638 = vrot.lane.b32.xlu0 %v429, 17
      %v639 = vpop.permute.xlu0 %638
      %640 = vrot.lane.b32.xlu0 %v454, 17
      %v641 = vpop.permute.xlu0 %640
      %642 = vrot.lane.b32.xlu0 %v455, 17
      %v643 = vpop.permute.xlu0 %642
      %644 = vrot.lane.b32.xlu0 %v446, 17
      %v645 = vpop.permute.xlu0 %644
      %646 = vrot.lane.b32.xlu0 %v456, 17
      %v647 = vpop.permute.xlu0 %646
      %648 = vrot.lane.b32.xlu0 %v457, 17
      %v649 = vpop.permute.xlu0 %648
      %650 = vrot.lane.b32.xlu0 %v452, 17
      %v651 = vpop.permute.xlu0 %650
      %652 = vrot.lane.b32.xlu0 %v459, 17
      %v653 = vpop.permute.xlu0 %652
      %654 = vrot.lane.b32.xlu0 %v466, 17
      %v655 = vpop.permute.xlu0 %654
      %656 = vrot.lane.b32.xlu0 %v461, 17
      %v657 = vpop.permute.xlu0 %656
      %658 = vrot.lane.b32.xlu0 %v463, 17
      %v659 = vpop.permute.xlu0 %658
      %660 = vrot.lane.b32.xlu0 %v467, 17
      %v661 = vpop.permute.xlu0 %660
      %662 = vrot.lane.b32.xlu0 %v465, 17
      %v663 = vpop.permute.xlu0 %662
      %664 = vrot.lane.b32.xlu0 %v475, 17
      %v665 = vpop.permute.xlu0 %664
      %666 = vrot.lane.b32.xlu0 %v487, 17
      %v667 = vpop.permute.xlu0 %666
      %668 = vrot.lane.b32.xlu0 %v488, 17
      %v669 = vpop.permute.xlu0 %668
      %670 = vrot.lane.b32.xlu0 %v481, 17
      %v671 = vpop.permute.xlu0 %670
      %672 = vrot.lane.b32.xlu0 %v489, 17
      %v673 = vpop.permute.xlu0 %672
      %674 = vrot.lane.b32.xlu0 %v490, 17
      %v675 = vpop.permute.xlu0 %674
      %676 = vrot.lane.b32.xlu0 %v498, 17
      %v677 = vpop.permute.xlu0 %676
      %678 = vrot.lane.b32.xlu0 %v510, 17
      %v679 = vpop.permute.xlu0 %678
      %680 = vrot.lane.b32.xlu0 %v511, 17
      %v681 = vpop.permute.xlu0 %680
      %682 = vrot.lane.b32.xlu0 %v504, 17
      %v683 = vpop.permute.xlu0 %682
      %684 = vrot.lane.b32.xlu0 %v512, 17
      %v685 = vpop.permute.xlu0 %684
      %686 = vrot.lane.b32.xlu0 %v513, 17
      %v687 = vpop.permute.xlu0 %686
      %688 = vrot.lane.b32.xlu0 %v521, 17
      %v689 = vpop.permute.xlu0 %688
      %690 = vrot.lane.b32.xlu0 %v533, 17
      %v691 = vpop.permute.xlu0 %690
      %692 = vrot.lane.b32.xlu0 %v534, 17
      %v693 = vpop.permute.xlu0 %692
      %694 = vrot.lane.b32.xlu0 %v527, 17
      %v695 = vpop.permute.xlu0 %694
      %696 = vrot.lane.b32.xlu0 %v535, 17
      %v697 = vpop.permute.xlu0 %696
      %698 = vrot.lane.b32.xlu0 %v536, 17
      %v699 = vpop.permute.xlu0 %698
      %700 = vrot.lane.b32.xlu0 %v544, 17
      %v701 = vpop.permute.xlu0 %700
      %702 = vrot.lane.b32.xlu0 %v556, 17
      %v703 = vpop.permute.xlu0 %702
      %704 = vrot.lane.b32.xlu0 %v557, 17
      %v705 = vpop.permute.xlu0 %704
      %706 = vrot.lane.b32.xlu0 %v550, 17
      %v707 = vpop.permute.xlu0 %706
      %708 = vrot.lane.b32.xlu0 %v558, 17
      %v709 = vpop.permute.xlu0 %708
      %710 = vrot.lane.b32.xlu0 %v559, 17
      %v711 = vpop.permute.xlu0 %710
      %v712 = vsel %vm379, %v605, %v607
      %v713 = vsel %vm379, %v607, %v609
      %v714 = vsel %vm379, %v611, %v613
      %v715 = vsel %vm379, %v613, %v615
      %v716 = vsel %vm379, %v617, %v619
      %v717 = vsel %vm379, %v619, %v621
      %v718 = vsel %vm379, %v623, %v625
      %v719 = vsel %vm379, %v625, %v627
      %v720 = vsel %vm379, %v629, %v631
      %v721 = vsel %vm379, %v631, %v633
      %v722 = vsel %vm379, %v635, %v637
      %v723 = vsel %vm379, %v637, %v639
      %v724 = vsel %vm379, %v641, %v643
      %v725 = vsel %vm379, %v643, %v645
      %v726 = vsel %vm379, %v647, %v649
      %v727 = vsel %vm379, %v649, %v651
      %v728 = vsel %vm379, %v653, %v655
      %v729 = vsel %vm379, %v655, %v657
      %v730 = vsel %vm379, %v659, %v661
      %v731 = vsel %vm379, %v661, %v663
      %v732 = vsel %vm379, %v665, %v667
      %v733 = vsel %vm379, %v667, %v669
      %v734 = vsel %vm379, %v671, %v673
      %v735 = vsel %vm379, %v673, %v675
      %v736 = vsel %vm379, %v677, %v679
      %v737 = vsel %vm379, %v679, %v681
      %v738 = vsel %vm379, %v683, %v685
      %v739 = vsel %vm379, %v685, %v687
      %v740 = vsel %vm379, %v689, %v691
      %v741 = vsel %vm379, %v691, %v693
      %v742 = vsel %vm379, %v695, %v697
      %v743 = vsel %vm379, %v697, %v699
      %v744 = vsel %vm379, %v701, %v703
      %v745 = vsel %vm379, %v703, %v705
      %v746 = vsel %vm379, %v707, %v709
      %v747 = vsel %vm379, %v709, %v711
      %vm784 = vcmask 261120
      %v786 = vsel %vm784, %v590, 0
      %v789 = vsel %vm784, %v593, 0
      %791 = vmatprep.subr.bf16.mxu0 %v713
      %792 = vmatpush1.bf16.msra.mxu0 %v712
      %793 = vmatprep.subr.bf16.mxu0 %v715
      %794 = vmatpush1.bf16.msra.mxu0 %v714
      %795 = vmatprep.subr.bf16.mxu0 %v717
      %796 = vmatpush1.bf16.msra.mxu0 %v716
      %797 = vmatprep.subr.bf16.mxu0 %v719
      %798 = vmatpush1.bf16.msra.mxu0 %v718
      %799 = vmatprep.subr.bf16.mxu0 %v721
      %800 = vmatpush1.bf16.msra.mxu0 %v720
      %801 = vmatprep.subr.bf16.mxu0 %v723
      %802 = vmatpush1.bf16.msra.mxu0 %v722
      %803 = vmatprep.subr.bf16.mxu0 %v725
      %804 = vmatpush1.bf16.msra.mxu0 %v724
      %805 = vmatprep.subr.bf16.mxu0 %v727
      %806 = vmatpush1.bf16.msra.mxu0 %v726
      %807 = vmatprep.subr.bf16.mxu0 %v729
      %808 = vmatpush1.bf16.msra.mxu0 %v728
      %809 = vmatprep.subr.bf16.mxu0 %v731
      %810 = vmatpush1.bf16.msra.mxu0 %v730
      %811 = vmatprep.subr.bf16.mxu0 %v733
      %812 = vmatpush1.bf16.msra.mxu0 %v732
      %813 = vmatprep.subr.bf16.mxu0 %v735
      %814 = vmatpush1.bf16.msra.mxu0 %v734
      %815 = vmatprep.subr.bf16.mxu0 %v737
      %816 = vmatpush1.bf16.msra.mxu0 %v736
      %817 = vmatprep.subr.bf16.mxu0 %v739
      %818 = vmatpush1.bf16.msra.mxu0 %v738
      %819 = vmatprep.subr.bf16.mxu0 %v741
      %820 = vmatpush1.bf16.msra.mxu0 %v740
      %821 = vmatprep.subr.bf16.mxu0 %v743
      %822 = vmatpush1.bf16.msra.mxu0 %v742
      %823 = vmatprep.mubr.bf16.mxu0 %v589
      %824 = vmatmul.mubr.bf16.gmra.mrb[0].mxu0 %v588
      %v825 = vpop.f32.mrb[0].mxu0
      %v826 = vadd.f32 0.0, %v825
      %v827 = vpop.f32.mrb[0].mxu0
      %v828 = vadd.f32 0.0, %v827
      %v829 = vpop.f32.mrb[0].mxu0
      %v830 = vadd.f32 0.0, %v829
      %v831 = vpop.f32.mrb[0].mxu0
      %v832 = vadd.f32 0.0, %v831
      %833 = vmatprep.mubr.bf16.mxu0 %v592
      %834 = vmatmul.mubr.bf16.gmra.mrb[0].mxu0 %v591
      %v835 = vpop.f32.mrb[0].mxu0
      %v836 = vadd.f32 0.0, %v835
      %v837 = vpop.f32.mrb[0].mxu0
      %v838 = vadd.f32 0.0, %v837
      %v839 = vpop.f32.mrb[0].mxu0
      %v840 = vadd.f32 0.0, %v839
      %v841 = vpop.f32.mrb[0].mxu0
      %v842 = vadd.f32 0.0, %v841
      %843 = vdwg.mxu0
      %844 = vmatprep.subr.bf16.mxu0 %v745
      %845 = vmatpush1.bf16.msra.mxu0 %v744
      %846 = vmatprep.subr.bf16.mxu0 %v747
      %847 = vmatpush1.bf16.msra.mxu0 %v746
      %848 = vmatprep.subr.bf16.mxu0 0
      %849 = vmatpush1.bf16.msra.mxu0 0
      %850 = vmatprep.subr.bf16.mxu0 0
      %851 = vmatpush1.bf16.msra.mxu0 0
      %852 = vmatprep.subr.bf16.mxu0 0
      %853 = vmatpush1.bf16.msra.mxu0 0
      %854 = vmatprep.subr.bf16.mxu0 0
      %855 = vmatpush1.bf16.msra.mxu0 0
      %856 = vmatprep.subr.bf16.mxu0 0
      %857 = vmatpush1.bf16.msra.mxu0 0
      %858 = vmatprep.subr.bf16.mxu0 0
      %859 = vmatpush1.bf16.msra.mxu0 0
      %860 = vmatprep.subr.bf16.mxu0 0
      %861 = vmatpush1.bf16.msra.mxu0 0
      %862 = vmatprep.subr.bf16.mxu0 0
      %863 = vmatpush1.bf16.msra.mxu0 0
      %864 = vmatprep.subr.bf16.mxu0 0
      %865 = vmatpush1.bf16.msra.mxu0 0
      %866 = vmatprep.subr.bf16.mxu0 0
      %867 = vmatpush1.bf16.msra.mxu0 0
      %868 = vmatprep.subr.bf16.mxu0 0
      %869 = vmatpush1.bf16.msra.mxu0 0
      %870 = vmatprep.subr.bf16.mxu0 0
      %871 = vmatpush1.bf16.msra.mxu0 0
      %872 = vmatprep.subr.bf16.mxu0 0
      %873 = vmatpush1.bf16.msra.mxu0 0
      %874 = vmatprep.subr.bf16.mxu0 0
      %875 = vmatpush1.bf16.msra.mxu0 0
      %876 = vmatprep.mubr.bf16.mxu0 0
      %877 = vmatmul.mubr.bf16.gmra.mrb[0].mxu0 %v786
      %v878 = vpop.f32.mrb[0].mxu0
      %v879 = vadd.f32 %v826, %v878
      %v880 = vpop.f32.mrb[0].mxu0
      %v881 = vadd.f32 %v828, %v880
      %v882 = vpop.f32.mrb[0].mxu0
      %v883 = vadd.f32 %v830, %v882
      %v884 = vpop.f32.mrb[0].mxu0
      %v885 = vadd.f32 %v832, %v884
      %886 = vmatprep.mubr.bf16.mxu0 0
      %887 = vmatmul.mubr.bf16.gmra.mrb[0].mxu0 %v789
      %v888 = vpop.f32.mrb[0].mxu0
      %v889 = vadd.f32 %v836, %v888
      %v890 = vpop.f32.mrb[0].mxu0
      %v891 = vadd.f32 %v838, %v890
      %v892 = vpop.f32.mrb[0].mxu0
      %v893 = vadd.f32 %v840, %v892
      %v894 = vpop.f32.mrb[0].mxu0
      %v895 = vadd.f32 %v842, %v894
      %896 = vdwg.mxu0
      %v897 = vpack.c.bf16 %v883, %v879
      %v898 = vpack.c.bf16 %v885, %v881
      %v899 = vpack.c.bf16 %v893, %v889
      %v900 = vpack.c.bf16 %v895, %v891
      %v905 = vunpack.c.l.b16 %v897
      %v906 = vunpack.c.l.b16 %v898
      %v907 = vunpack.c.h.b16 %v897
      %v908 = vunpack.c.h.b16 %v898
      %v909 = vunpack.c.l.b16 %v899
      %v910 = vunpack.c.l.b16 %v900
      %v911 = vunpack.c.h.b16 %v899
      %v912 = vunpack.c.h.b16 %v900
      %v913 = vpack.c.b16 %v906, %v905
      %v914 = vpack.c.b16 %v908, %v907
      %v915 = vpack.c.b16 %v910, %v909
      %v916 = vpack.c.b16 %v912, %v911
      %921 = vst [vmem:[%s205] sm:$0xff] %v913
      %922 = vst [vmem:[%s205 + $0x8] sm:$0xff] %v914
      %923 = vst [vmem:[%s205 + $0x10] sm:$0xff] %v915
      %924 = vst [vmem:[%s205 + $0x18] sm:$0xff] %v916
      %v925 = vadd.f32 %v879, %v881
      %926 = vadd.xlane.f32.xlu0 %v925
      %v927 = vpop.xlane.xlu0 %926
      %v928 = vadd.f32 %v883, %v885
      %929 = vadd.xlane.f32.xlu0 %v928
      %v930 = vpop.xlane.xlu0 %929
      %v931 = vadd.f32 %v889, %v891
      %932 = vadd.xlane.f32.xlu0 %v931
      %v933 = vpop.xlane.xlu0 %932
      %v934 = vadd.f32 %v893, %v895
      %935 = vadd.xlane.f32.xlu0 %v934
      %v936 = vpop.xlane.xlu0 %935
      %vm937 = vcmask 7168
      %938 = vst.msk [vmem:[%s210] sm:$0xff] %vm937, %v927
      %939 = vst.msk [vmem:[%s210 + $0x8] sm:$0xff] %vm937, %v930
      %940 = vst.msk [vmem:[%s210 + $0x10] sm:$0xff] %vm937, %v933
      %941 = vst.msk [vmem:[%s210 + $0x18] sm:$0xff] %vm937, %v936
      %v942 = vmul.f32 %v879, %v879
      %v943 = vmul.f32 %v881, %v881
      %v944 = vmul.f32 %v883, %v883
      %v945 = vmul.f32 %v885, %v885
      %v946 = vmul.f32 %v889, %v889
      %v947 = vmul.f32 %v891, %v891
      %v948 = vmul.f32 %v893, %v893
      %v949 = vmul.f32 %v895, %v895
      %v950 = vadd.f32 %v942, %v943
      %951 = vadd.xlane.f32.xlu0 %v950
      %v952 = vpop.xlane.xlu0 %951
      %v953 = vadd.f32 %v944, %v945
      %954 = vadd.xlane.f32.xlu0 %v953
      %v955 = vpop.xlane.xlu0 %954
      %v956 = vadd.f32 %v946, %v947
      %957 = vadd.xlane.f32.xlu0 %v956
      %v958 = vpop.xlane.xlu0 %957
      %v959 = vadd.f32 %v948, %v949
      %960 = vadd.xlane.f32.xlu0 %v959
      %v961 = vpop.xlane.xlu0 %960
      %vm962 = vcmask 15368
      %963 = vst.msk [vmem:[%s210] sm:$0xff] %vm962, %v952
      %964 = vst.msk [vmem:[%s210 + $0x8] sm:$0xff] %vm962, %v955
      %965 = vst.msk [vmem:[%s210 + $0x10] sm:$0xff] %vm962, %v958
      %966 = vst.msk [vmem:[%s210 + $0x18] sm:$0xff] %vm962, %v961
      %p967 = scmp.lt.s32.totalorder %s16, 1
      %s968 = scalar_select %p967, %s16, 1
      %s969 = smul.addr %s968, 8
      %s970 = smul.addr %s969, 4
      %s971 = scalar_lea.vmem %s3, %s970
      %p972 = scmp.lt.s32.totalorder %s16, 1
      %s973 = scalar_select %p972, %s16, 1
      %s974 = smul.addr %s973, 4
      %s975 = smul.addr %s974, 8
      %s976 = scalar_lea.vmem %s4, %s975
      // Predicated region
      $region33: #{block_forward.3} parent=31 // pred_check
        %p977 = pneg %p102
      $region34: #{block_forward.3} parent=31 // pred_check_branch
        %979 = sbr.rel (%p977) target = $region36
      $region35: #{block_forward.3} parent=31 // pred_region
        _
      $region36: #{block_forward.3} parent=31 // pred_fallthru
        _
      // Predicated region
      $region37: #{block_forward.3} parent=31 // pred_check
        %p980 = pneg %p128
      $region38: #{block_forward.3} parent=31 // pred_check_branch
        %982 = sbr.rel (%p980) target = $region40
      $region39: #{block_forward.3} parent=31 // pred_region
        _
      $region40: #{block_forward.3} parent=31 // pred_fallthru
        _
    $region32: #{block_forward.3} parent=5 // pred_fallthru
      _
    %p983 = scmp.le.s32.totalorder 2, %s11
    // Predicated region
    $region41: #{block_forward.3} parent=5 // pred_check
      %p984 = pneg %p983
    $region42: #{block_forward.3} parent=5 // pred_check_branch
      %986 = sbr.rel (%p984) target = $region44
    $region43: #{block_forward.3} parent=5 // pred_region
      %s987 = ssub.s32 %s11, 2
      // Predicated region
      $region45: #{block_forward.3} parent=43 // pred_check
        %p988 = pneg %p108
      $region46: #{block_forward.3} parent=43 // pred_check_branch
        %990 = sbr.rel (%p988) target = $region48
      $region47: #{block_forward.3} parent=43 // pred_region
        %p991 = scmp.lt.s32.totalorder %s17, 1
        %s992 = scalar_select %p991, %s17, 1
        %s993 = smul.addr %s992, 8
        %s994 = smul.addr %s993, 4
        %s995 = scalar_lea.vmem %s3, %s994
      $region48: #{block_forward.3} parent=43 // pred_fallthru
        _
      // Predicated region
      $region49: #{block_forward.3} parent=43 // pred_check
        %p996 = pneg %p134
      $region50: #{block_forward.3} parent=43 // pred_check_branch
        %998 = sbr.rel (%p996) target = $region52
      $region51: #{block_forward.3} parent=43 // pred_region
        %p999 = scmp.lt.s32.totalorder %s17, 1
        %s1000 = scalar_select %p999, %s17, 1
        %s1001 = smul.addr %s1000, 4
        %s1002 = smul.addr %s1001, 8
        %s1003 = scalar_lea.vmem %s4, %s1002
      $region52: #{block_forward.3} parent=43 // pred_fallthru
        _
    $region44: #{block_forward.3} parent=5 // pred_fallthru
      _
  $region6: #{block_forward.3} parent=0 // loop_footer
    %s15 = sadd.s32 1, %s11
  $region7: #{block_forward.3} parent=0 // loop_footer_branch
    %10 = sbr.rel target = $region3
  $region8: #{block_forward.3} parent=0 // loop_exit
    _

// kernel: block_forward.4
$region0: #{block_forward.4}
  #allocation0 [shape = 'u32[]', space=smem, size = 0x4, offset = 0x4, fixed_abs, tag = 'smem constant byte address 0x4 - core index']
  #allocation1 [shape = 'u32[144,128]{1,0:T(1,128)}', space=vmem, size = 0x12000, scoped, tag = 'internal scratch']
  #allocation2 [shape = 'bf16[32,512]{1,0:T(16,128)(2,1)}', space=vmem, size = 0x8000, scoped, tag = 'scratch operand']
  %s0 = inlined_call_operand.vmem [shape: bf16[2,32,256], index: 0, kind: input, shape index: {}]
  %s1 = inlined_call_operand.vmem [shape: f32[2,32,2], index: 1, kind: input, shape index: {}]
  %s2 = inlined_call_operand.vmem [shape: f32[32,1], index: 2, kind: input, shape index: {}]
  %s3 = inlined_call_operand.vmem [shape: f32[32,1], index: 3, kind: input, shape index: {}]
  %s4 = inlined_call_operand.vmem [shape: bf16[32,288], index: 4, kind: input, shape index: {}]
  %s5 = inlined_call_operand.vmem [shape: bf16[2,256], index: 5, kind: input, shape index: {}]
  %s6 = inlined_call_operand.vmem [shape: bf16[2,32,256], index: 6, kind: output, shape index: {0}]
  %s7 = inlined_call_operand.vmem [shape: f32[2,32,2], index: 7, kind: output, shape index: {1}]
  %8 = xla_tuple %s6, %s7
  %s9 = sld [smem:[#allocation0]]
  $region65: #{block_forward.4} parent=0
    _
  %s11 = ssub.s32 1, %s9
  %s12 = scalar_select 0, %s11, %s9
  loop: start=0, step=1, limit=4
  $region2: #{block_forward.4} parent=0 // loop_pre_header
    _
  $region3: #{block_forward.4} parent=0 // loop_header
    %s14 = sphi 0, %s18
    %p15 = scmp.ge.s32.totalorder %s14, 4
    %s24 = sphi 0, %s26
    %s27 = sphi 0, %s24
    %s28 = sphi 0, %s27
    %s44 = sphi 0, %s28
    %s48 = sphi 0, %s48
    %s50 = sphi 0, %s48
    %s51 = sphi 0, %s50
    %s65 = sphi 0, %s51
    %s69 = sphi 0, %s69
    %s71 = sphi 0, %s69
    %s72 = sphi 0, %s71
    %s86 = sphi 0, %s72
    %s90 = sphi 0, %s90
    %s92 = sphi 0, %s90
    %s93 = sphi 0, %s92
    %s107 = sphi 0, %s93
    %s111 = sphi 0, %s111
    %s113 = sphi 0, %s111
    %s114 = sphi 0, %s113
    %s128 = sphi 0, %s114
    %s132 = sphi 0, %s132
    %s134 = sphi 0, %s132
    %s135 = sphi 0, %s134
    %s149 = sphi 0, %s135
    %s155 = sphi 0, %s157
    %s158 = sphi 0, %s155
    %s159 = sphi 0, %s158
    %s175 = sphi 0, %s159
    %s181 = sphi 0, %s183
    %s184 = sphi 0, %s181
    %s185 = sphi 0, %s184
    %s201 = sphi 0, %s185
  $region4: #{block_forward.4} parent=0 // loop_header_branch
    %17 = sbr.rel (%p15) target = $region8
  $region5: #{block_forward.4} parent=0 // loop_body
    %s19 = ssub.s32 %s14, 1
    %s20 = ssub.s32 %s14, 2
    %s21 = sadd.s32 %s14, 1
    %s22 = ssub.s32 %s14, %s21
    %p23 = scmp.eq.s32.totalorder %s22, 0
    %s25 = sadd.s32 %s24, 1
    %s26 = scalar_select %p23, %s24, %s25
    %p29 = pneg %p23
    %p30 = scmp.eq.s32.totalorder %s14, 1
    %p31 = por %p29, %p30
    %p32 = scmp.ne.s32.totalorder %s24, %s27
    %p33 = scmp.eq.s32.totalorder %s14, 0
    %p34 = por %p32, %p33
    %p35 = scmp.ne.s32.totalorder %s24, %s27
    %p36 = scmp.eq.s32.totalorder %s19, 1
    %p37 = por %p35, %p36
    %p38 = scmp.ne.s32.totalorder %s27, %s28
    %p39 = scmp.eq.s32.totalorder %s19, 0
    %p40 = por %p38, %p39
    %p41 = scmp.ne.s32.totalorder %s27, %s28
    %p42 = scmp.eq.s32.totalorder %s20, 1
    %p43 = por %p41, %p42
    %p45 = scmp.ne.s32.totalorder %s28, %s44
    %p46 = scmp.eq.s32.totalorder %s20, 0
    %p47 = por %p45, %p46
    %s49 = sadd.s32 %s48, 1
    %p52 = scmp.eq.s32.totalorder %s14, 1
    %p53 = scmp.ne.s32.totalorder %s48, %s50
    %p54 = scmp.eq.s32.totalorder %s14, 0
    %p55 = por %p53, %p54
    %p56 = scmp.ne.s32.totalorder %s48, %s50
    %p57 = scmp.eq.s32.totalorder %s19, 1
    %p58 = por %p56, %p57
    %p59 = scmp.ne.s32.totalorder %s50, %s51
    %p60 = scmp.eq.s32.totalorder %s19, 0
    %p61 = por %p59, %p60
    %p62 = scmp.ne.s32.totalorder %s50, %s51
    %p63 = scmp.eq.s32.totalorder %s20, 1
    %p64 = por %p62, %p63
    %p66 = scmp.ne.s32.totalorder %s51, %s65
    %p67 = scmp.eq.s32.totalorder %s20, 0
    %p68 = por %p66, %p67
    %s70 = sadd.s32 %s69, 1
    %p73 = scmp.eq.s32.totalorder %s14, 1
    %p74 = scmp.ne.s32.totalorder %s69, %s71
    %p75 = scmp.eq.s32.totalorder %s14, 0
    %p76 = por %p74, %p75
    %p77 = scmp.ne.s32.totalorder %s69, %s71
    %p78 = scmp.eq.s32.totalorder %s19, 1
    %p79 = por %p77, %p78
    %p80 = scmp.ne.s32.totalorder %s71, %s72
    %p81 = scmp.eq.s32.totalorder %s19, 0
    %p82 = por %p80, %p81
    %p83 = scmp.ne.s32.totalorder %s71, %s72
    %p84 = scmp.eq.s32.totalorder %s20, 1
    %p85 = por %p83, %p84
    %p87 = scmp.ne.s32.totalorder %s72, %s86
    %p88 = scmp.eq.s32.totalorder %s20, 0
    %p89 = por %p87, %p88
    %s91 = sadd.s32 %s90, 1
    %p94 = scmp.eq.s32.totalorder %s14, 1
    %p95 = scmp.ne.s32.totalorder %s90, %s92
    %p96 = scmp.eq.s32.totalorder %s14, 0
    %p97 = por %p95, %p96
    %p98 = scmp.ne.s32.totalorder %s90, %s92
    %p99 = scmp.eq.s32.totalorder %s19, 1
    %p100 = por %p98, %p99
    %p101 = scmp.ne.s32.totalorder %s92, %s93
    %p102 = scmp.eq.s32.totalorder %s19, 0
    %p103 = por %p101, %p102
    %p104 = scmp.ne.s32.totalorder %s92, %s93
    %p105 = scmp.eq.s32.totalorder %s20, 1
    %p106 = por %p104, %p105
    %p108 = scmp.ne.s32.totalorder %s93, %s107
    %p109 = scmp.eq.s32.totalorder %s20, 0
    %p110 = por %p108, %p109
    %s112 = sadd.s32 %s111, 1
    %p115 = scmp.eq.s32.totalorder %s14, 1
    %p116 = scmp.ne.s32.totalorder %s111, %s113
    %p117 = scmp.eq.s32.totalorder %s14, 0
    %p118 = por %p116, %p117
    %p119 = scmp.ne.s32.totalorder %s111, %s113
    %p120 = scmp.eq.s32.totalorder %s19, 1
    %p121 = por %p119, %p120
    %p122 = scmp.ne.s32.totalorder %s113, %s114
    %p123 = scmp.eq.s32.totalorder %s19, 0
    %p124 = por %p122, %p123
    %p125 = scmp.ne.s32.totalorder %s113, %s114
    %p126 = scmp.eq.s32.totalorder %s20, 1
    %p127 = por %p125, %p126
    %p129 = scmp.ne.s32.totalorder %s114, %s128
    %p130 = scmp.eq.s32.totalorder %s20, 0
    %p131 = por %p129, %p130
    %s133 = sadd.s32 %s132, 1
    %p136 = scmp.eq.s32.totalorder %s14, 1
    %p137 = scmp.ne.s32.totalorder %s132, %s134
    %p138 = scmp.eq.s32.totalorder %s14, 0
    %p139 = por %p137, %p138
    %p140 = scmp.ne.s32.totalorder %s132, %s134
    %p141 = scmp.eq.s32.totalorder %s19, 1
    %p142 = por %p140, %p141
    %p143 = scmp.ne.s32.totalorder %s134, %s135
    %p144 = scmp.eq.s32.totalorder %s19, 0
    %p145 = por %p143, %p144
    %p146 = scmp.ne.s32.totalorder %s134, %s135
    %p147 = scmp.eq.s32.totalorder %s20, 1
    %p148 = por %p146, %p147
    %p150 = scmp.ne.s32.totalorder %s135, %s149
    %p151 = scmp.eq.s32.totalorder %s20, 0
    %p152 = por %p150, %p151
    %s153 = ssub.s32 %s14, %s21
    %p154 = scmp.eq.s32.totalorder %s153, 0
    %s156 = sadd.s32 %s155, 1
    %s157 = scalar_select %p154, %s155, %s156
    %p160 = pneg %p154
    %p161 = scmp.eq.s32.totalorder %s14, 1
    %p162 = por %p160, %p161
    %p163 = scmp.ne.s32.totalorder %s155, %s158
    %p164 = scmp.eq.s32.totalorder %s14, 0
    %p165 = por %p163, %p164
    %p166 = scmp.ne.s32.totalorder %s155, %s158
    %p167 = scmp.eq.s32.totalorder %s19, 1
    %p168 = por %p166, %p167
    %p169 = scmp.ne.s32.totalorder %s158, %s159
    %p170 = scmp.eq.s32.totalorder %s19, 0
    %p171 = por %p169, %p170
    %p172 = scmp.ne.s32.totalorder %s158, %s159
    %p173 = scmp.eq.s32.totalorder %s20, 1
    %p174 = por %p172, %p173
    %p176 = scmp.ne.s32.totalorder %s159, %s175
    %p177 = scmp.eq.s32.totalorder %s20, 0
    %p178 = por %p176, %p177
    %s179 = ssub.s32 %s14, %s21
    %p180 = scmp.eq.s32.totalorder %s179, 0
    %s182 = sadd.s32 %s181, 1
    %s183 = scalar_select %p180, %s181, %s182
    %p186 = pneg %p180
    %p187 = scmp.eq.s32.totalorder %s14, 1
    %p188 = por %p186, %p187
    %p189 = scmp.ne.s32.totalorder %s181, %s184
    %p190 = scmp.eq.s32.totalorder %s14, 0
    %p191 = por %p189, %p190
    %p192 = scmp.ne.s32.totalorder %s181, %s184
    %p193 = scmp.eq.s32.totalorder %s19, 1
    %p194 = por %p192, %p193
    %p195 = scmp.ne.s32.totalorder %s184, %s185
    %p196 = scmp.eq.s32.totalorder %s19, 0
    %p197 = por %p195, %p196
    %p198 = scmp.ne.s32.totalorder %s184, %s185
    %p199 = scmp.eq.s32.totalorder %s20, 1
    %p200 = por %p198, %p199
    %p202 = scmp.ne.s32.totalorder %s185, %s201
    %p203 = scmp.eq.s32.totalorder %s20, 0
    %p204 = por %p202, %p203
    %p205 = scmp.le.s32.totalorder 1, %s14
    %p206 = scmp.lt.s32.totalorder %s14, 3
    %p207 = pnand %p205, %p206
    %p208 = pneg %p207
    // Predicated region
    $region9: #{block_forward.4} parent=5 // pred_check
      _
    $region10: #{block_forward.4} parent=5 // pred_check_branch
      %210 = sbr.rel (%p207) target = $region12
    $region11: #{block_forward.4} parent=5 // pred_region
      %s211 = ssub.s32 %s14, 1
      // Predicated region
      $region13: #{block_forward.4} parent=11 // pred_check
        %p212 = pneg %p61
      $region14: #{block_forward.4} parent=11 // pred_check_branch
        %214 = sbr.rel (%p212) target = $region16
      $region15: #{block_forward.4} parent=11 // pred_region
        _
      $region16: #{block_forward.4} parent=11 // pred_fallthru
        _
      // Predicated region
      $region17: #{block_forward.4} parent=11 // pred_check
        %p215 = pneg %p82
      $region18: #{block_forward.4} parent=11 // pred_check_branch
        %217 = sbr.rel (%p215) target = $region20
      $region19: #{block_forward.4} parent=11 // pred_region
        _
      $region20: #{block_forward.4} parent=11 // pred_fallthru
        _
      // Predicated region
      $region21: #{block_forward.4} parent=11 // pred_check
        %p218 = pneg %p103
      $region22: #{block_forward.4} parent=11 // pred_check_branch
        %220 = sbr.rel (%p218) target = $region24
      $region23: #{block_forward.4} parent=11 // pred_region
        _
      $region24: #{block_forward.4} parent=11 // pred_fallthru
        _
      // Predicated region
      $region25: #{block_forward.4} parent=11 // pred_check
        %p221 = pneg %p124
      $region26: #{block_forward.4} parent=11 // pred_check_branch
        %223 = sbr.rel (%p221) target = $region28
      $region27: #{block_forward.4} parent=11 // pred_region
        _
      $region28: #{block_forward.4} parent=11 // pred_fallthru
        _
      // Predicated region
      $region29: #{block_forward.4} parent=11 // pred_check
        %p224 = pneg %p145
      $region30: #{block_forward.4} parent=11 // pred_check_branch
        %226 = sbr.rel (%p224) target = $region32
      $region31: #{block_forward.4} parent=11 // pred_region
        _
      $region32: #{block_forward.4} parent=11 // pred_fallthru
        _
    $region12: #{block_forward.4} parent=5 // pred_fallthru
      _
    %p227 = scmp.lt.s32.totalorder %s14, 2
    // Predicated region
    $region33: #{block_forward.4} parent=5 // pred_check
      %p228 = pneg %p227
    $region34: #{block_forward.4} parent=5 // pred_check_branch
      %230 = sbr.rel (%p228) target = $region36
    $region35: #{block_forward.4} parent=5 // pred_region
      // Predicated region
      $region37: #{block_forward.4} parent=35 // pred_check
        %p231 = pneg %p34
      $region38: #{block_forward.4} parent=35 // pred_check_branch
        %233 = sbr.rel (%p231) target = $region40
      $region39: #{block_forward.4} parent=35 // pred_region
        %p234 = scmp.lt.s32.totalorder %s14, 1
        %s235 = scalar_select %p234, %s14, 1
        %s236 = smul.addr %s235, 8
        %s237 = smul.addr %s236, 4
        %s238 = scalar_lea.vmem %s0, %s237
      $region40: #{block_forward.4} parent=35 // pred_fallthru
        _
    $region36: #{block_forward.4} parent=5 // pred_fallthru
      _
    %p239 = scmp.le.s32.totalorder 1, %s14
    %p240 = scmp.lt.s32.totalorder %s14, 3
    %p241 = pnand %p239, %p240
    %p242 = pneg %p241
    // Predicated region
    $region41: #{block_forward.4} parent=5 // pred_check
      _
    $region42: #{block_forward.4} parent=5 // pred_check_branch
      %244 = sbr.rel (%p241) target = $region44
    $region43: #{block_forward.4} parent=5 // pred_region
      %s245 = ssub.s32 %s14, 1
      %p246 = scmp.lt.s32.totalorder %s19, 1
      %s247 = scalar_select %p246, %s19, 1
      %s248 = smul.addr %s247, 8
      %s249 = smul.addr %s248, 4
      %s250 = scalar_lea.vmem %s0, %s249
      %p251 = pneg %p40
      %p252 = pneg %p37
      %p253 = pneg %p61
      %p254 = pneg %p58
      %p255 = pneg %p82
      %p256 = pneg %p79
      %p257 = pneg %p103
      %p258 = pneg %p100
      %p259 = pneg %p124
      %p260 = pneg %p121
      %p261 = pneg %p145
      %p262 = pneg %p142
      %p263 = pneg %p171
      %p264 = pneg %p168
      %p265 = scmp.lt.s32.totalorder %s19, 1
      %s266 = scalar_select %p265, %s19, 1
      %s267 = smul.addr %s266, 8
      %s268 = smul.addr %s267, 4
      %s269 = scalar_lea.vmem %s6, %s268
      %p270 = pneg %p197
      %p271 = pneg %p194
      %p272 = scmp.lt.s32.totalorder %s19, 1
      %s273 = scalar_select %p272, %s19, 1
      %s274 = smul.addr %s273, 4
      %s275 = smul.addr %s274, 8
      %s276 = scalar_lea.vmem %s7, %s275
      %p277 = scmp.lt.s32.totalorder %s19, 1
      %s278 = scalar_select %p277, %s19, 1
      %s279 = smul.addr %s278, 8
      %s280 = smul.addr %s279, 4
      %s281 = scalar_lea.vmem %s0, %s280
      %p282 = scmp.lt.s32.totalorder %s19, 1
      %s283 = scalar_select %p282, %s19, 1
      %s284 = smul.addr %s283, 8
      %s285 = smul.addr %s284, 4
      %s286 = scalar_lea.vmem %s6, %s285
      %p287 = scmp.lt.s32.totalorder %s19, 1
      %s288 = scalar_select %p287, %s19, 1
      %s289 = smul.addr %s288, 4
      %s290 = smul.addr %s289, 8
      %s291 = scalar_lea.vmem %s7, %s290
      %v293 = vld [vmem:[%s1] sm:$0xff]
      %v294 = vld [vmem:[%s1 + $0x8] sm:$0xff]
      %v295 = vld [vmem:[%s1 + $0x10] sm:$0xff]
      %v296 = vld [vmem:[%s1 + $0x18] sm:$0xff]
      %v297 = vld [vmem:[%s1 + $0x20] sm:$0xff]
      %v298 = vld [vmem:[%s1 + $0x28] sm:$0xff]
      %v299 = vld [vmem:[%s1 + $0x30] sm:$0xff]
      %v300 = vld [vmem:[%s1 + $0x38] sm:$0xff]
      %v301 = vld [vmem:[%s2] sm:$0xff]
      %v302 = vld [vmem:[%s2 + $0x8] sm:$0xff]
      %v303 = vld [vmem:[%s2 + $0x10] sm:$0xff]
      %v304 = vld [vmem:[%s2 + $0x18] sm:$0xff]
      %v305 = vld [vmem:[%s3] sm:$0xff]
      %v306 = vld [vmem:[%s3 + $0x8] sm:$0xff]
      %v307 = vld [vmem:[%s3 + $0x10] sm:$0xff]
      %v308 = vld [vmem:[%s3 + $0x18] sm:$0xff]
      %vm309 = vcmask 7168
      %v310 = vsel %vm309, %v293, 0.0
      %v311 = vsel %vm309, %v297, 0.0
      %v312 = vadd.f32 %v310, %v311
      %v313 = vsel %vm309, %v294, 0.0
      %v314 = vsel %vm309, %v298, 0.0
      %v315 = vadd.f32 %v313, %v314
      %v316 = vsel %vm309, %v295, 0.0
      %v317 = vsel %vm309, %v299, 0.0
      %v318 = vadd.f32 %v316, %v317
      %v319 = vsel %vm309, %v296, 0.0
      %v320 = vsel %vm309, %v300, 0.0
      %v321 = vadd.f32 %v319, %v320
      %vm322 = vcmask 15368
      %v323 = vsel %vm322, %v293, 0.0
      %v324 = vsel %vm322, %v297, 0.0
      %v325 = vadd.f32 %v323, %v324
      %v326 = vsel %vm322, %v294, 0.0
      %v327 = vsel %vm322, %v298, 0.0
      %v328 = vadd.f32 %v326, %v327
      %v329 = vsel %vm322, %v295, 0.0
      %v330 = vsel %vm322, %v299, 0.0
      %v331 = vadd.f32 %v329, %v330
      %v332 = vsel %vm322, %v296, 0.0
      %v333 = vsel %vm322, %v300, 0.0
      %v334 = vadd.f32 %v332, %v333
      %v335 = vmul.f32 %v312, 0.001953125
      %v336 = vmul.f32 %v315, 0.001953125
      %v337 = vmul.f32 %v318, 0.001953125
      %v338 = vmul.f32 %v321, 0.001953125
      %v339 = vmul.f32 %v325, 0.001953125
      %v340 = vmul.f32 %v328, 0.001953125
      %v341 = vmul.f32 %v331, 0.001953125
      %v342 = vmul.f32 %v334, 0.001953125
      %v343 = vmul.f32 %v335, %v335
      %v344 = vmul.f32 %v336, %v336
      %v345 = vmul.f32 %v337, %v337
      %v346 = vmul.f32 %v338, %v338
      %351 = vrot.lane.b32.xlu0 %v343, 1
      %v352 = vpop.permute.xlu0 %351
      %353 = vrot.lane.b32.xlu0 %v344, 1
      %v354 = vpop.permute.xlu0 %353
      %355 = vrot.lane.b32.xlu0 %v345, 1
      %v356 = vpop.permute.xlu0 %355
      %357 = vrot.lane.b32.xlu0 %v346, 1
      %v358 = vpop.permute.xlu0 %357
      %v363 = vsub.f32 %v339, %v352
      %v364 = vsub.f32 %v340, %v354
      %v365 = vsub.f32 %v341, %v356
      %v366 = vsub.f32 %v342, %v358
      %v367 = vmax.f32 %v363, 0.0
      %v368 = vmax.f32 %v364, 0.0
      %v369 = vmax.f32 %v365, 0.0
      %v370 = vmax.f32 %v366, 0.0
      %v371 = vadd.f32 %v367, 1e-05
      %v372 = vadd.f32 %v368, 1e-05
      %v373 = vadd.f32 %v369, 1e-05
      %v374 = vadd.f32 %v370, 1e-05
      %v375 = vrsqrt.pop %v371
      %v376 = vrsqrt.pop %v372
      %v377 = vrsqrt.pop %v373
      %v378 = vrsqrt.pop %v374
      %383 = vrot.lane.b32.xlu0 %v375, 127
      %v384 = vpop.permute.xlu0 %383
      %385 = vrot.lane.b32.xlu0 %v376, 127
      %v386 = vpop.permute.xlu0 %385
      %387 = vrot.lane.b32.xlu0 %v377, 127
      %v388 = vpop.permute.xlu0 %387
      %389 = vrot.lane.b32.xlu0 %v378, 127
      %v390 = vpop.permute.xlu0 %389
      %v395 = vmul.f32 %v301, %v384
      %v396 = vmul.f32 %v302, %v386
      %v397 = vmul.f32 %v303, %v388
      %v398 = vmul.f32 %v304, %v390
      %v399 = vmul.f32 %v335, %v395
      %v400 = vmul.f32 %v336, %v396
      %v401 = vmul.f32 %v337, %v397
      %v402 = vmul.f32 %v338, %v398
      %v403 = vsub.f32 %v305, %v399
      %v404 = vsub.f32 %v306, %v400
      %v405 = vsub.f32 %v307, %v401
      %v406 = vsub.f32 %v308, %v402
      %v407 = vld [vmem:[%s281] sm:$0xff]
      %v408 = vld [vmem:[%s281 + $0x8] sm:$0xff]
      %v409 = vld [vmem:[%s281 + $0x10] sm:$0xff]
      %v410 = vld [vmem:[%s281 + $0x18] sm:$0xff]
      %v411 = vunpack.c.l.bf16 %v407
      %v412 = vunpack.c.h.bf16 %v407
      %v413 = vunpack.c.l.bf16 %v408
      %v414 = vunpack.c.h.bf16 %v408
      %v415 = vunpack.c.l.bf16 %v409
      %v416 = vunpack.c.h.bf16 %v409
      %v417 = vunpack.c.l.bf16 %v410
      %v418 = vunpack.c.h.bf16 %v410
      %420 = vset.pattern.permute.xlu0 0
      %421 = vperm.xlu0 %420, %v395
      %v422 = vpop.permute.xlu0 %421
      %425 = vset.pattern.permute.xlu0 0
      %426 = vperm.xlu0 %425, %v396
      %v427 = vpop.permute.xlu0 %426
      %430 = vset.pattern.permute.xlu0 0
      %431 = vperm.xlu0 %430, %v397
      %v432 = vpop.permute.xlu0 %431
      %435 = vset.pattern.permute.xlu0 0
      %436 = vperm.xlu0 %435, %v398
      %v437 = vpop.permute.xlu0 %436
      %v439 = vmul.f32 %v411, %v422
      %v440 = vmul.f32 %v412, %v422
      %v441 = vmul.f32 %v413, %v427
      %v442 = vmul.f32 %v414, %v427
      %v443 = vmul.f32 %v415, %v432
      %v444 = vmul.f32 %v416, %v432
      %v445 = vmul.f32 %v417, %v437
      %v446 = vmul.f32 %v418, %v437
      %448 = vset.pattern.permute.xlu0 0
      %449 = vperm.xlu0 %448, %v403
      %v450 = vpop.permute.xlu0 %449
      %453 = vset.pattern.permute.xlu0 0
      %454 = vperm.xlu0 %453, %v404
      %v455 = vpop.permute.xlu0 %454
      %458 = vset.pattern.permute.xlu0 0
      %459 = vperm.xlu0 %458, %v405
      %v460 = vpop.permute.xlu0 %459
      %463 = vset.pattern.permute.xlu0 0
      %464 = vperm.xlu0 %463, %v406
      %v465 = vpop.permute.xlu0 %464
      %v467 = vadd.f32 %v439, %v450
      %v468 = vadd.f32 %v440, %v450
      %v469 = vadd.f32 %v441, %v455
      %v470 = vadd.f32 %v442, %v455
      %v471 = vadd.f32 %v443, %v460
      %v472 = vadd.f32 %v444, %v460
      %v473 = vadd.f32 %v445, %v465
      %v474 = vadd.f32 %v446, %v465
      %v475 = vmax.f32 %v467, 0.0
      %v476 = vmax.f32 %v468, 0.0
      %v477 = vmax.f32 %v469, 0.0
      %v478 = vmax.f32 %v470, 0.0
      %v479 = vmax.f32 %v471, 0.0
      %v480 = vmax.f32 %v472, 0.0
      %v481 = vmax.f32 %v473, 0.0
      %v482 = vmax.f32 %v474, 0.0
      %483 = vst [vmem:[#allocation2] sm:$0xff] 0
      %484 = vst [vmem:[#allocation2 + $0x20] sm:$0xff] 0
      %485 = vst [vmem:[#allocation2 + $0x18] sm:$0xff] 0
      %486 = vst [vmem:[#allocation2 + $0x38] sm:$0xff] 0
      %v487 = vpack.c.bf16 %v477, %v475
      %v488 = vpack.c.bf16 %v478, %v476
      %v489 = vpack.c.bf16 %v481, %v479
      %v490 = vpack.c.bf16 %v482, %v480
      %491 = vst [vmem:[#allocation2 + $0x8] sm:$0xff] %v487
      %492 = vst [vmem:[#allocation2 + $0x10] sm:$0xff] %v488
      %493 = vst [vmem:[#allocation2 + $0x28] sm:$0xff] %v489
      %494 = vst [vmem:[#allocation2 + $0x30] sm:$0xff] %v490
      %v495 = vld [vmem:[%s5] sm:$0x3]
      %v496 = vld [vmem:[#allocation2] sm:$0xff]
      %v497 = vld [vmem:[#allocation2 + $0x8] sm:$0xff]
      %v498 = vld [vmem:[#allocation2 + $0x10] sm:$0xff]
      %v499 = vld [vmem:[#allocation2 + $0x20] sm:$0xff]
      %v500 = vld [vmem:[#allocation2 + $0x28] sm:$0xff]
      %v501 = vld [vmem:[#allocation2 + $0x30] sm:$0xff]
      %v504 = vunpack.c.l.s4 1966171168
      %v505 = vunpack.c.0.s8 %v504
      %v506 = vlaneseq
      %v507 = vshrl.u32 %v506, 7
      %v508 = vsub.s32 %v505, %v507
      %v509 = vrot.slane %v495, %v508
      %v510 = vcombine.high %v509, %v509
      %v512 = vunpack.c.l.s4 1966171168
      %v513 = vunpack.c.0.s8 %v512
      %v514 = vlaneseq
      %v515 = vshrl.u32 %v514, 7
      %v516 = vsub.s32 %v513, %v515
      %v517 = vrot.slane %v509, %v516
      %v519 = vunpack.c.l.s4 1966171168
      %v520 = vunpack.c.0.s8 %v519
      %v521 = vlaneseq
      %v522 = vshrl.u32 %v521, 7
      %v523 = vsub.s32 %v520, %v522
      %v524 = vrot.slane %v510, %v523
      %v526 = vpack.i.b16 %v517, %v517
      %v528 = vlaneseq
      %v529 = vshrl.u32 %v528, 7
      %v530 = vsub.s32 0, %v529
      %v531 = vrot.slane %v526, %v530
      %v533 = vpack.i.b16 %v524, %v524
      %v535 = vlaneseq
      %v536 = vshrl.u32 %v535, 7
      %v537 = vsub.s32 0, %v536
      %v538 = vrot.slane %v533, %v537
      %541 = vrot.lane.b32.xlu0 %v531, 111
      %v542 = vpop.permute.xlu0 %541
      %543 = vrot.lane.b32.xlu0 %v538, 111
      %v544 = vpop.permute.xlu0 %543
      %vm545 = vcmask 908288
      %v546 = vsel %vm545, %v542, %v544
      %v550 = vmul.bf16 %v496, %v542
      %v551 = vmul.bf16 %v497, %v546
      %v552 = vmul.bf16 %v498, %v544
      %v553 = vmul.bf16 %v499, %v542
      %v554 = vmul.bf16 %v500, %v546
      %v555 = vmul.bf16 %v501, %v544
      %v556 = vshrl.u32 %v517, 16
      %v557 = vpack.i.b16 %v556, %v556
      %v559 = vlaneseq
      %v560 = vshrl.u32 %v559, 7
      %v561 = vsub.s32 0, %v560
      %v562 = vrot.slane %v557, %v561
      %v563 = vshrl.u32 %v524, 16
      %v564 = vpack.i.b16 %v563, %v563
      %v566 = vlaneseq
      %v567 = vshrl.u32 %v566, 7
      %v568 = vsub.s32 0, %v567
      %v569 = vrot.slane %v564, %v568
      %572 = vrot.lane.b32.xlu0 %v562, 113
      %v573 = vpop.permute.xlu0 %572
      %574 = vrot.lane.b32.xlu0 %v569, 113
      %v575 = vpop.permute.xlu0 %574
      %vm576 = vcmask 924672
      %v577 = vsel %vm576, %v573, %v575
      %v581 = vmul.bf16 %v496, %v573
      %v582 = vmul.bf16 %v497, %v577
      %v583 = vmul.bf16 %v498, %v575
      %v584 = vmul.bf16 %v499, %v573
      %v585 = vmul.bf16 %v500, %v577
      %v586 = vmul.bf16 %v501, %v575
      %587 = vrot.lane.b32.xlu0 %v531, 127
      %v588 = vpop.permute.xlu0 %587
      %589 = vrot.lane.b32.xlu0 %v538, 127
      %v590 = vpop.permute.xlu0 %589
      %vm591 = vcmask 1039360
      %v592 = vsel %vm591, %v588, %v590
      %v596 = vmul.bf16 %v496, %v588
      %v597 = vmul.bf16 %v497, %v592
      %v598 = vmul.bf16 %v498, %v590
      %v599 = vmul.bf16 %v499, %v588
      %v600 = vmul.bf16 %v500, %v592
      %v601 = vmul.bf16 %v501, %v590
      %v602 = vld [vmem:[#allocation2 + $0x8] sm:$0xff]
      %v603 = vld [vmem:[#allocation2 + $0x10] sm:$0xff]
      %v604 = vld [vmem:[#allocation2 + $0x18] sm:$0xff]
      %v605 = vld [vmem:[#allocation2 + $0x28] sm:$0xff]
      %v606 = vld [vmem:[#allocation2 + $0x30] sm:$0xff]
      %v607 = vld [vmem:[#allocation2 + $0x38] sm:$0xff]
      %608 = vrot.lane.b32.xlu0 %v562, 1
      %v609 = vpop.permute.xlu0 %608
      %610 = vrot.lane.b32.xlu0 %v569, 1
      %v611 = vpop.permute.xlu0 %610
      %vm612 = vcmask 7168
      %v613 = vsel %vm612, %v609, %v611
      %v617 = vmul.bf16 %v602, %v609
      %v618 = vmul.bf16 %v603, %v613
      %v619 = vmul.bf16 %v604, %v611
      %v620 = vmul.bf16 %v605, %v609
      %v621 = vmul.bf16 %v606, %v613
      %v622 = vmul.bf16 %v607, %v611
      %623 = vrot.lane.b32.xlu0 %v531, 15
      %v624 = vpop.permute.xlu0 %623
      %625 = vrot.lane.b32.xlu0 %v538, 15
      %v626 = vpop.permute.xlu0 %625
      %vm627 = vcmask 121856
      %v628 = vsel %vm627, %v624, %v626
      %v632 = vmul.bf16 %v602, %v624
      %v633 = vmul.bf16 %v603, %v628
      %v634 = vmul.bf16 %v604, %v626
      %v635 = vmul.bf16 %v605, %v624
      %v636 = vmul.bf16 %v606, %v628
      %v637 = vmul.bf16 %v607, %v626
      %638 = vrot.lane.b32.xlu0 %v562, 17
      %v639 = vpop.permute.xlu0 %638
      %640 = vrot.lane.b32.xlu0 %v569, 17
      %v641 = vpop.permute.xlu0 %640
      %vm642 = vcmask 138240
      %v643 = vsel %vm642, %v639, %v641
      %v647 = vmul.bf16 %v602, %v639
      %v648 = vmul.bf16 %v603, %v643
      %v649 = vmul.bf16 %v604, %v641
      %v650 = vmul.bf16 %v605, %v639
      %v651 = vmul.bf16 %v606, %v643
      %v652 = vmul.bf16 %v607, %v641
      %659 = vrot.lane.b32.xlu0 %v496, 127
      %v660 = vpop.permute.xlu0 %659
      %661 = vrot.lane.b32.xlu0 %v497, 127
      %v662 = vpop.permute.xlu0 %661
      %663 = vrot.lane.b32.xlu0 %v498, 127
      %v664 = vpop.permute.xlu0 %663
      %665 = vrot.lane.b32.xlu0 %v499, 127
      %v666 = vpop.permute.xlu0 %665
      %667 = vrot.lane.b32.xlu0 %v500, 127
      %v668 = vpop.permute.xlu0 %667
      %669 = vrot.lane.b32.xlu0 %v501, 127
      %v670 = vpop.permute.xlu0 %669
      %v671 = vsel %vm591, %v660, %v662
      %v672 = vsel %vm591, %v662, %v664
      %v673 = vsel %vm591, %v666, %v668
      %v674 = vsel %vm591, %v668, %v670
      %681 = vrot.lane.b32.xlu0 %v581, 126
      %v682 = vpop.permute.xlu0 %681
      %683 = vrot.lane.b32.xlu0 %v582, 126
      %v684 = vpop.permute.xlu0 %683
      %685 = vrot.lane.b32.xlu0 %v583, 126
      %v686 = vpop.permute.xlu0 %685
      %687 = vrot.lane.b32.xlu0 %v584, 126
      %v688 = vpop.permute.xlu0 %687
      %689 = vrot.lane.b32.xlu0 %v585, 126
      %v690 = vpop.permute.xlu0 %689
      %691 = vrot.lane.b32.xlu0 %v586, 126
      %v692 = vpop.permute.xlu0 %691
      %vm693 = vcmask 1031168
      %v694 = vsel %vm693, %v682, %v684
      %v695 = vsel %vm693, %v684, %v686
      %v696 = vsel %vm693, %v688, %v690
      %v697 = vsel %vm693, %v690, %v692
      %704 = vrot.lane.b32.xlu0 %v596, 112
      %v705 = vpop.permute.xlu0 %704
      %706 = vrot.lane.b32.xlu0 %v597, 112
      %v707 = vpop.permute.xlu0 %706
      %708 = vrot.lane.b32.xlu0 %v598, 112
      %v709 = vpop.permute.xlu0 %708
      %710 = vrot.lane.b32.xlu0 %v599, 112
      %v711 = vpop.permute.xlu0 %710
      %712 = vrot.lane.b32.xlu0 %v600, 112
      %v713 = vpop.permute.xlu0 %712
      %714 = vrot.lane.b32.xlu0 %v601, 112
      %v715 = vpop.permute.xlu0 %714
      %vm716 = vcmask 916480
      %v717 = vsel %vm716, %v705, %v707
      %v718 = vsel %vm716, %v707, %v709
      %v719 = vsel %vm716, %v711, %v713
      %v720 = vsel %vm716, %v713, %v715
      %721 = vrot.lane.b32.xlu0 %v497, 111
      %v722 = vpop.permute.xlu0 %721
      %723 = vrot.lane.b32.xlu0 %v498, 111
      %v724 = vpop.permute.xlu0 %723
      %725 = vrot.lane.b32.xlu0 %v500, 111
      %v726 = vpop.permute.xlu0 %725
      %727 = vrot.lane.b32.xlu0 %v501, 111
      %v728 = vpop.permute.xlu0 %727
      %v729 = vsel %vm545, %v722, %v724
      %v730 = vsel %vm545, %v726, %v728
      %737 = vrot.lane.b32.xlu0 %v617, 110
      %v738 = vpop.permute.xlu0 %737
      %739 = vrot.lane.b32.xlu0 %v618, 110
      %v740 = vpop.permute.xlu0 %739
      %741 = vrot.lane.b32.xlu0 %v619, 110
      %v742 = vpop.permute.xlu0 %741
      %743 = vrot.lane.b32.xlu0 %v620, 110
      %v744 = vpop.permute.xlu0 %743
      %745 = vrot.lane.b32.xlu0 %v621, 110
      %v746 = vpop.permute.xlu0 %745
      %747 = vrot.lane.b32.xlu0 %v622, 110
      %v748 = vpop.permute.xlu0 %747
      %vm749 = vcmask 900096
      %v750 = vsel %vm749, %v738, %v740
      %v751 = vsel %vm749, %v740, %v742
      %v752 = vsel %vm749, %v744, %v746
      %v753 = vsel %vm749, %v746, %v748
      %760 = vrot.lane.b32.xlu0 %v632, 96
      %v761 = vpop.permute.xlu0 %760
      %762 = vrot.lane.b32.xlu0 %v633, 96
      %v763 = vpop.permute.xlu0 %762
      %764 = vrot.lane.b32.xlu0 %v634, 96
      %v765 = vpop.permute.xlu0 %764
      %766 = vrot.lane.b32.xlu0 %v635, 96
      %v767 = vpop.permute.xlu0 %766
      %768 = vrot.lane.b32.xlu0 %v636, 96
      %v769 = vpop.permute.xlu0 %768
      %770 = vrot.lane.b32.xlu0 %v637, 96
      %v771 = vpop.permute.xlu0 %770
      %vm772 = vcmask 785408
      %v773 = vsel %vm772, %v761, %v763
      %v774 = vsel %vm772, %v763, %v765
      %v775 = vsel %vm772, %v767, %v769
      %v776 = vsel %vm772, %v769, %v771
      %783 = vrot.lane.b32.xlu0 %v602, 95
      %v784 = vpop.permute.xlu0 %783
      %785 = vrot.lane.b32.xlu0 %v603, 95
      %v786 = vpop.permute.xlu0 %785
      %787 = vrot.lane.b32.xlu0 %v604, 95
      %v788 = vpop.permute.xlu0 %787
      %789 = vrot.lane.b32.xlu0 %v605, 95
      %v790 = vpop.permute.xlu0 %789
      %791 = vrot.lane.b32.xlu0 %v606, 95
      %v792 = vpop.permute.xlu0 %791
      %793 = vrot.lane.b32.xlu0 %v607, 95
      %v794 = vpop.permute.xlu0 %793
      %vm795 = vcmask 777216
      %v796 = vsel %vm795, %v784, %v786
      %v797 = vsel %vm795, %v786, %v788
      %v798 = vsel %vm795, %v790, %v792
      %v799 = vsel %vm795, %v792, %v794
      %806 = vrot.lane.b32.xlu0 %v647, 94
      %v807 = vpop.permute.xlu0 %806
      %808 = vrot.lane.b32.xlu0 %v648, 94
      %v809 = vpop.permute.xlu0 %808
      %810 = vrot.lane.b32.xlu0 %v649, 94
      %v811 = vpop.permute.xlu0 %810
      %812 = vrot.lane.b32.xlu0 %v650, 94
      %v813 = vpop.permute.xlu0 %812
      %814 = vrot.lane.b32.xlu0 %v651, 94
      %v815 = vpop.permute.xlu0 %814
      %816 = vrot.lane.b32.xlu0 %v652, 94
      %v817 = vpop.permute.xlu0 %816
      %vm818 = vcmask 769024
      %v819 = vsel %vm818, %v807, %v809
      %v820 = vsel %vm818, %v809, %v811
      %v821 = vsel %vm818, %v813, %v815
      %v822 = vsel %vm818, %v815, %v817
      %v823 = vld [vmem:[%s4] sm:$0xff]
      %v824 = vld [vmem:[%s4 + $0x8] sm:$0xf]
      %v825 = vld [vmem:[%s4 + $0xc] sm:$0xff]
      %v826 = vld [vmem:[%s4 + $0x14] sm:$0xf]
      %v827 = vld [vmem:[%s4 + $0x18] sm:$0xff]
      %v828 = vld [vmem:[%s4 + $0x20] sm:$0xf]
      %v829 = vld [vmem:[%s4 + $0x24] sm:$0xff]
      %v830 = vld [vmem:[%s4 + $0x2c] sm:$0xf]
      %v839 = vunpack.c.l.b16 %v823
      %v840 = vunpack.c.h.b16 %v823
      %v841 = vunpack.c.l.b16 %v824
      %v842 = vunpack.c.l.b16 %v825
      %v843 = vunpack.c.h.b16 %v825
      %v844 = vunpack.c.l.b16 %v826
      %v845 = vunpack.c.l.b16 %v827
      %v846 = vunpack.c.h.b16 %v827
      %v847 = vunpack.c.l.b16 %v828
      %v848 = vunpack.c.l.b16 %v829
      %v849 = vunpack.c.h.b16 %v829
      %v850 = vunpack.c.l.b16 %v830
      %v851 = vpack.c.b16 %v842, %v839
      %v852 = vpack.c.b16 %v843, %v840
      %v853 = vpack.c.b16 %v844, %v841
      %v854 = vpack.c.b16 %v848, %v845
      %v855 = vpack.c.b16 %v849, %v846
      %v856 = vpack.c.b16 %v850, %v847
      %867 = vrot.lane.b32.xlu0 %v550, 17
      %v868 = vpop.permute.xlu0 %867
      %869 = vrot.lane.b32.xlu0 %v551, 17
      %v870 = vpop.permute.xlu0 %869
      %871 = vrot.lane.b32.xlu0 %v552, 17
      %v872 = vpop.permute.xlu0 %871
      %873 = vrot.lane.b32.xlu0 %v553, 17
      %v874 = vpop.permute.xlu0 %873
      %875 = vrot.lane.b32.xlu0 %v554, 17
      %v876 = vpop.permute.xlu0 %875
      %877 = vrot.lane.b32.xlu0 %v555, 17
      %v878 = vpop.permute.xlu0 %877
      %879 = vrot.lane.b32.xlu0 %v671, 17
      %v880 = vpop.permute.xlu0 %879
      %881 = vrot.lane.b32.xlu0 %v672, 17
      %v882 = vpop.permute.xlu0 %881
      %883 = vrot.lane.b32.xlu0 %v664, 17
      %v884 = vpop.permute.xlu0 %883
      %885 = vrot.lane.b32.xlu0 %v673, 17
      %v886 = vpop.permute.xlu0 %885
      %887 = vrot.lane.b32.xlu0 %v674, 17
      %v888 = vpop.permute.xlu0 %887
      %889 = vrot.lane.b32.xlu0 %v670, 17
      %v890 = vpop.permute.xlu0 %889
      %891 = vrot.lane.b32.xlu0 %v694, 17
      %v892 = vpop.permute.xlu0 %891
      %893 = vrot.lane.b32.xlu0 %v695, 17
      %v894 = vpop.permute.xlu0 %893
      %895 = vrot.lane.b32.xlu0 %v686, 17
      %v896 = vpop.permute.xlu0 %895
      %897 = vrot.lane.b32.xlu0 %v696, 17
      %v898 = vpop.permute.xlu0 %897
      %899 = vrot.lane.b32.xlu0 %v697, 17
      %v900 = vpop.permute.xlu0 %899
      %901 = vrot.lane.b32.xlu0 %v692, 17
      %v902 = vpop.permute.xlu0 %901
      %903 = vrot.lane.b32.xlu0 %v717, 17
      %v904 = vpop.permute.xlu0 %903
      %905 = vrot.lane.b32.xlu0 %v718, 17
      %v906 = vpop.permute.xlu0 %905
      %907 = vrot.lane.b32.xlu0 %v709, 17
      %v908 = vpop.permute.xlu0 %907
      %909 = vrot.lane.b32.xlu0 %v719, 17
      %v910 = vpop.permute.xlu0 %909
      %911 = vrot.lane.b32.xlu0 %v720, 17
      %v912 = vpop.permute.xlu0 %911
      %913 = vrot.lane.b32.xlu0 %v715, 17
      %v914 = vpop.permute.xlu0 %913
      %915 = vrot.lane.b32.xlu0 %v722, 17
      %v916 = vpop.permute.xlu0 %915
      %917 = vrot.lane.b32.xlu0 %v729, 17
      %v918 = vpop.permute.xlu0 %917
      %919 = vrot.lane.b32.xlu0 %v724, 17
      %v920 = vpop.permute.xlu0 %919
      %921 = vrot.lane.b32.xlu0 %v726, 17
      %v922 = vpop.permute.xlu0 %921
      %923 = vrot.lane.b32.xlu0 %v730, 17
      %v924 = vpop.permute.xlu0 %923
      %925 = vrot.lane.b32.xlu0 %v728, 17
      %v926 = vpop.permute.xlu0 %925
      %927 = vrot.lane.b32.xlu0 %v738, 17
      %v928 = vpop.permute.xlu0 %927
      %929 = vrot.lane.b32.xlu0 %v750, 17
      %v930 = vpop.permute.xlu0 %929
      %931 = vrot.lane.b32.xlu0 %v751, 17
      %v932 = vpop.permute.xlu0 %931
      %933 = vrot.lane.b32.xlu0 %v744, 17
      %v934 = vpop.permute.xlu0 %933
      %935 = vrot.lane.b32.xlu0 %v752, 17
      %v936 = vpop.permute.xlu0 %935
      %937 = vrot.lane.b32.xlu0 %v753, 17
      %v938 = vpop.permute.xlu0 %937
      %939 = vrot.lane.b32.xlu0 %v761, 17
      %v940 = vpop.permute.xlu0 %939
      %941 = vrot.lane.b32.xlu0 %v773, 17
      %v942 = vpop.permute.xlu0 %941
      %943 = vrot.lane.b32.xlu0 %v774, 17
      %v944 = vpop.permute.xlu0 %943
      %945 = vrot.lane.b32.xlu0 %v767, 17
      %v946 = vpop.permute.xlu0 %945
      %947 = vrot.lane.b32.xlu0 %v775, 17
      %v948 = vpop.permute.xlu0 %947
      %949 = vrot.lane.b32.xlu0 %v776, 17
      %v950 = vpop.permute.xlu0 %949
      %951 = vrot.lane.b32.xlu0 %v784, 17
      %v952 = vpop.permute.xlu0 %951
      %953 = vrot.lane.b32.xlu0 %v796, 17
      %v954 = vpop.permute.xlu0 %953
      %955 = vrot.lane.b32.xlu0 %v797, 17
      %v956 = vpop.permute.xlu0 %955
      %957 = vrot.lane.b32.xlu0 %v790, 17
      %v958 = vpop.permute.xlu0 %957
      %959 = vrot.lane.b32.xlu0 %v798, 17
      %v960 = vpop.permute.xlu0 %959
      %961 = vrot.lane.b32.xlu0 %v799, 17
      %v962 = vpop.permute.xlu0 %961
      %963 = vrot.lane.b32.xlu0 %v807, 17
      %v964 = vpop.permute.xlu0 %963
      %965 = vrot.lane.b32.xlu0 %v819, 17
      %v966 = vpop.permute.xlu0 %965
      %967 = vrot.lane.b32.xlu0 %v820, 17
      %v968 = vpop.permute.xlu0 %967
      %969 = vrot.lane.b32.xlu0 %v813, 17
      %v970 = vpop.permute.xlu0 %969
      %971 = vrot.lane.b32.xlu0 %v821, 17
      %v972 = vpop.permute.xlu0 %971
      %973 = vrot.lane.b32.xlu0 %v822, 17
      %v974 = vpop.permute.xlu0 %973
      %v975 = vsel %vm642, %v868, %v870
      %v976 = vsel %vm642, %v870, %v872
      %v977 = vsel %vm642, %v874, %v876
      %v978 = vsel %vm642, %v876, %v878
      %v979 = vsel %vm642, %v880, %v882
      %v980 = vsel %vm642, %v882, %v884
      %v981 = vsel %vm642, %v886, %v888
      %v982 = vsel %vm642, %v888, %v890
      %v983 = vsel %vm642, %v892, %v894
      %v984 = vsel %vm642, %v894, %v896
      %v985 = vsel %vm642, %v898, %v900
      %v986 = vsel %vm642, %v900, %v902
      %v987 = vsel %vm642, %v904, %v906
      %v988 = vsel %vm642, %v906, %v908
      %v989 = vsel %vm642, %v910, %v912
      %v990 = vsel %vm642, %v912, %v914
      %v991 = vsel %vm642, %v916, %v918
      %v992 = vsel %vm642, %v918, %v920
      %v993 = vsel %vm642, %v922, %v924
      %v994 = vsel %vm642, %v924, %v926
      %v995 = vsel %vm642, %v928, %v930
      %v996 = vsel %vm642, %v930, %v932
      %v997 = vsel %vm642, %v934, %v936
      %v998 = vsel %vm642, %v936, %v938
      %v999 = vsel %vm642, %v940, %v942
      %v1000 = vsel %vm642, %v942, %v944
      %v1001 = vsel %vm642, %v946, %v948
      %v1002 = vsel %vm642, %v948, %v950
      %v1003 = vsel %vm642, %v952, %v954
      %v1004 = vsel %vm642, %v954, %v956
      %v1005 = vsel %vm642, %v958, %v960
      %v1006 = vsel %vm642, %v960, %v962
      %v1007 = vsel %vm642, %v964, %v966
      %v1008 = vsel %vm642, %v966, %v968
      %v1009 = vsel %vm642, %v970, %v972
      %v1010 = vsel %vm642, %v972, %v974
      %vm1047 = vcmask 261120
      %v1049 = vsel %vm1047, %v853, 0
      %v1052 = vsel %vm1047, %v856, 0
      %1054 = vmatprep.subr.bf16.mxu0 %v976
      %1055 = vmatpush1.bf16.msra.mxu0 %v975
      %1056 = vmatprep.subr.bf16.mxu0 %v978
      %1057 = vmatpush1.bf16.msra.mxu0 %v977
      %1058 = vmatprep.subr.bf16.mxu0 %v980
      %1059 = vmatpush1.bf16.msra.mxu0 %v979
      %1060 = vmatprep.subr.bf16.mxu0 %v982
      %1061 = vmatpush1.bf16.msra.mxu0 %v981
      %1062 = vmatprep.subr.bf16.mxu0 %v984
      %1063 = vmatpush1.bf16.msra.mxu0 %v983
      %1064 = vmatprep.subr.bf16.mxu0 %v986
      %1065 = vmatpush1.bf16.msra.mxu0 %v985
      %1066 = vmatprep.subr.bf16.mxu0 %v988
      %1067 = vmatpush1.bf16.msra.mxu0 %v987
      %1068 = vmatprep.subr.bf16.mxu0 %v990
      %1069 = vmatpush1.bf16.msra.mxu0 %v989
      %1070 = vmatprep.subr.bf16.mxu0 %v992
      %1071 = vmatpush1.bf16.msra.mxu0 %v991
      %1072 = vmatprep.subr.bf16.mxu0 %v994
      %1073 = vmatpush1.bf16.msra.mxu0 %v993
      %1074 = vmatprep.subr.bf16.mxu0 %v996
      %1075 = vmatpush1.bf16.msra.mxu0 %v995
      %1076 = vmatprep.subr.bf16.mxu0 %v998
      %1077 = vmatpush1.bf16.msra.mxu0 %v997
      %1078 = vmatprep.subr.bf16.mxu0 %v1000
      %1079 = vmatpush1.bf16.msra.mxu0 %v999
      %1080 = vmatprep.subr.bf16.mxu0 %v1002
      %1081 = vmatpush1.bf16.msra.mxu0 %v1001
      %1082 = vmatprep.subr.bf16.mxu0 %v1004
      %1083 = vmatpush1.bf16.msra.mxu0 %v1003
      %1084 = vmatprep.subr.bf16.mxu0 %v1006
      %1085 = vmatpush1.bf16.msra.mxu0 %v1005
      %1086 = vmatprep.mubr.bf16.mxu0 %v852
      %1087 = vmatmul.mubr.bf16.gmra.mrb[0].mxu0 %v851
      %v1088 = vpop.f32.mrb[0].mxu0
      %v1089 = vadd.f32 0.0, %v1088
      %v1090 = vpop.f32.mrb[0].mxu0
      %v1091 = vadd.f32 0.0, %v1090
      %v1092 = vpop.f32.mrb[0].mxu0
      %v1093 = vadd.f32 0.0, %v1092
      %v1094 = vpop.f32.mrb[0].mxu0
      %v1095 = vadd.f32 0.0, %v1094
      %1096 = vmatprep.mubr.bf16.mxu0 %v855
      %1097 = vmatmul.mubr.bf16.gmra.mrb[0].mxu0 %v854
      %v1098 = vpop.f32.mrb[0].mxu0
      %v1099 = vadd.f32 0.0, %v1098
      %v1100 = vpop.f32.mrb[0].mxu0
      %v1101 = vadd.f32 0.0, %v1100
      %v1102 = vpop.f32.mrb[0].mxu0
      %v1103 = vadd.f32 0.0, %v1102
      %v1104 = vpop.f32.mrb[0].mxu0
      %v1105 = vadd.f32 0.0, %v1104
      %1106 = vdwg.mxu0
      %1107 = vmatprep.subr.bf16.mxu0 %v1008
      %1108 = vmatpush1.bf16.msra.mxu0 %v1007
      %1109 = vmatprep.subr.bf16.mxu0 %v1010
      %1110 = vmatpush1.bf16.msra.mxu0 %v1009
      %1111 = vmatprep.subr.bf16.mxu0 0
      %1112 = vmatpush1.bf16.msra.mxu0 0
      %1113 = vmatprep.subr.bf16.mxu0 0
      %1114 = vmatpush1.bf16.msra.mxu0 0
      %1115 = vmatprep.subr.bf16.mxu0 0
      %1116 = vmatpush1.bf16.msra.mxu0 0
      %1117 = vmatprep.subr.bf16.mxu0 0
      %1118 = vmatpush1.bf16.msra.mxu0 0
      %1119 = vmatprep.subr.bf16.mxu0 0
      %1120 = vmatpush1.bf16.msra.mxu0 0
      %1121 = vmatprep.subr.bf16.mxu0 0
      %1122 = vmatpush1.bf16.msra.mxu0 0
      %1123 = vmatprep.subr.bf16.mxu0 0
      %1124 = vmatpush1.bf16.msra.mxu0 0
      %1125 = vmatprep.subr.bf16.mxu0 0
      %1126 = vmatpush1.bf16.msra.mxu0 0
      %1127 = vmatprep.subr.bf16.mxu0 0
      %1128 = vmatpush1.bf16.msra.mxu0 0
      %1129 = vmatprep.subr.bf16.mxu0 0
      %1130 = vmatpush1.bf16.msra.mxu0 0
      %1131 = vmatprep.subr.bf16.mxu0 0
      %1132 = vmatpush1.bf16.msra.mxu0 0
      %1133 = vmatprep.subr.bf16.mxu0 0
      %1134 = vmatpush1.bf16.msra.mxu0 0
      %1135 = vmatprep.subr.bf16.mxu0 0
      %1136 = vmatpush1.bf16.msra.mxu0 0
      %1137 = vmatprep.subr.bf16.mxu0 0
      %1138 = vmatpush1.bf16.msra.mxu0 0
      %1139 = vmatprep.mubr.bf16.mxu0 0
      %1140 = vmatmul.mubr.bf16.gmra.mrb[0].mxu0 %v1049
      %v1141 = vpop.f32.mrb[0].mxu0
      %v1142 = vadd.f32 %v1089, %v1141
      %v1143 = vpop.f32.mrb[0].mxu0
      %v1144 = vadd.f32 %v1091, %v1143
      %v1145 = vpop.f32.mrb[0].mxu0
      %v1146 = vadd.f32 %v1093, %v1145
      %v1147 = vpop.f32.mrb[0].mxu0
      %v1148 = vadd.f32 %v1095, %v1147
      %1149 = vmatprep.mubr.bf16.mxu0 0
      %1150 = vmatmul.mubr.bf16.gmra.mrb[0].mxu0 %v1052
      %v1151 = vpop.f32.mrb[0].mxu0
      %v1152 = vadd.f32 %v1099, %v1151
      %v1153 = vpop.f32.mrb[0].mxu0
      %v1154 = vadd.f32 %v1101, %v1153
      %v1155 = vpop.f32.mrb[0].mxu0
      %v1156 = vadd.f32 %v1103, %v1155
      %v1157 = vpop.f32.mrb[0].mxu0
      %v1158 = vadd.f32 %v1105, %v1157
      %1159 = vdwg.mxu0
      %v1160 = vpack.c.bf16 %v1146, %v1142
      %v1161 = vpack.c.bf16 %v1148, %v1144
      %v1162 = vpack.c.bf16 %v1156, %v1152
      %v1163 = vpack.c.bf16 %v1158, %v1154
      %v1168 = vunpack.c.l.b16 %v1160
      %v1169 = vunpack.c.l.b16 %v1161
      %v1170 = vunpack.c.h.b16 %v1160
      %v1171 = vunpack.c.h.b16 %v1161
      %v1172 = vunpack.c.l.b16 %v1162
      %v1173 = vunpack.c.l.b16 %v1163
      %v1174 = vunpack.c.h.b16 %v1162
      %v1175 = vunpack.c.h.b16 %v1163
      %v1176 = vpack.c.b16 %v1169, %v1168
      %v1177 = vpack.c.b16 %v1171, %v1170
      %v1178 = vpack.c.b16 %v1173, %v1172
      %v1179 = vpack.c.b16 %v1175, %v1174
      %1184 = vst [vmem:[%s286] sm:$0xff] %v1176
      %1185 = vst [vmem:[%s286 + $0x8] sm:$0xff] %v1177
      %1186 = vst [vmem:[%s286 + $0x10] sm:$0xff] %v1178
      %1187 = vst [vmem:[%s286 + $0x18] sm:$0xff] %v1179
      %v1188 = vadd.f32 %v1142, %v1144
      %1189 = vadd.xlane.f32.xlu0 %v1188
      %v1190 = vpop.xlane.xlu0 %1189
      %v1191 = vadd.f32 %v1146, %v1148
      %1192 = vadd.xlane.f32.xlu0 %v1191
      %v1193 = vpop.xlane.xlu0 %1192
      %v1194 = vadd.f32 %v1152, %v1154
      %1195 = vadd.xlane.f32.xlu0 %v1194
      %v1196 = vpop.xlane.xlu0 %1195
      %v1197 = vadd.f32 %v1156, %v1158
      %1198 = vadd.xlane.f32.xlu0 %v1197
      %v1199 = vpop.xlane.xlu0 %1198
      %1200 = vst.msk [vmem:[%s291] sm:$0xff] %vm309, %v1190
      %1201 = vst.msk [vmem:[%s291 + $0x8] sm:$0xff] %vm309, %v1193
      %1202 = vst.msk [vmem:[%s291 + $0x10] sm:$0xff] %vm309, %v1196
      %1203 = vst.msk [vmem:[%s291 + $0x18] sm:$0xff] %vm309, %v1199
      %v1204 = vmul.f32 %v1142, %v1142
      %v1205 = vmul.f32 %v1144, %v1144
      %v1206 = vmul.f32 %v1146, %v1146
      %v1207 = vmul.f32 %v1148, %v1148
      %v1208 = vmul.f32 %v1152, %v1152
      %v1209 = vmul.f32 %v1154, %v1154
      %v1210 = vmul.f32 %v1156, %v1156
      %v1211 = vmul.f32 %v1158, %v1158
      %v1212 = vadd.f32 %v1204, %v1205
      %1213 = vadd.xlane.f32.xlu0 %v1212
      %v1214 = vpop.xlane.xlu0 %1213
      %v1215 = vadd.f32 %v1206, %v1207
      %1216 = vadd.xlane.f32.xlu0 %v1215
      %v1217 = vpop.xlane.xlu0 %1216
      %v1218 = vadd.f32 %v1208, %v1209
      %1219 = vadd.xlane.f32.xlu0 %v1218
      %v1220 = vpop.xlane.xlu0 %1219
      %v1221 = vadd.f32 %v1210, %v1211
      %1222 = vadd.xlane.f32.xlu0 %v1221
      %v1223 = vpop.xlane.xlu0 %1222
      %1224 = vst.msk [vmem:[%s291] sm:$0xff] %vm322, %v1214
      %1225 = vst.msk [vmem:[%s291 + $0x8] sm:$0xff] %vm322, %v1217
      %1226 = vst.msk [vmem:[%s291 + $0x10] sm:$0xff] %vm322, %v1220
      %1227 = vst.msk [vmem:[%s291 + $0x18] sm:$0xff] %vm322, %v1223
      %p1228 = scmp.lt.s32.totalorder %s19, 1
      %s1229 = scalar_select %p1228, %s19, 1
      %s1230 = smul.addr %s1229, 8
      %s1231 = smul.addr %s1230, 4
      %s1232 = scalar_lea.vmem %s6, %s1231
      %p1233 = scmp.lt.s32.totalorder %s19, 1
      %s1234 = scalar_select %p1233, %s19, 1
      %s1235 = smul.addr %s1234, 4
      %s1236 = smul.addr %s1235, 8
      %s1237 = scalar_lea.vmem %s7, %s1236
      // Predicated region
      $region45: #{block_forward.4} parent=43 // pred_check
        %p1238 = pneg %p168
      $region46: #{block_forward.4} parent=43 // pred_check_branch
        %1240 = sbr.rel (%p1238) target = $region48
      $region47: #{block_forward.4} parent=43 // pred_region
        _
      $region48: #{block_forward.4} parent=43 // pred_fallthru
        _
      // Predicated region
      $region49: #{block_forward.4} parent=43 // pred_check
        %p1241 = pneg %p194
      $region50: #{block_forward.4} parent=43 // pred_check_branch
        %1243 = sbr.rel (%p1241) target = $region52
      $region51: #{block_forward.4} parent=43 // pred_region
        _
      $region52: #{block_forward.4} parent=43 // pred_fallthru
        _
    $region44: #{block_forward.4} parent=5 // pred_fallthru
      _
    %p1244 = scmp.le.s32.totalorder 2, %s14
    // Predicated region
    $region53: #{block_forward.4} parent=5 // pred_check
      %p1245 = pneg %p1244
    $region54: #{block_forward.4} parent=5 // pred_check_branch
      %1247 = sbr.rel (%p1245) target = $region56
    $region55: #{block_forward.4} parent=5 // pred_region
      %s1248 = ssub.s32 %s14, 2
      // Predicated region
      $region57: #{block_forward.4} parent=55 // pred_check
        %p1249 = pneg %p174
      $region58: #{block_forward.4} parent=55 // pred_check_branch
        %1251 = sbr.rel (%p1249) target = $region60
      $region59: #{block_forward.4} parent=55 // pred_region
        %p1252 = scmp.lt.s32.totalorder %s20, 1
        %s1253 = scalar_select %p1252, %s20, 1
        %s1254 = smul.addr %s1253, 8
        %s1255 = smul.addr %s1254, 4
        %s1256 = scalar_lea.vmem %s6, %s1255
      $region60: #{block_forward.4} parent=55 // pred_fallthru
        _
      // Predicated region
      $region61: #{block_forward.4} parent=55 // pred_check
        %p1257 = pneg %p200
      $region62: #{block_forward.4} parent=55 // pred_check_branch
        %1259 = sbr.rel (%p1257) target = $region64
      $region63: #{block_forward.4} parent=55 // pred_region
        %p1260 = scmp.lt.s32.totalorder %s20, 1
        %s1261 = scalar_select %p1260, %s20, 1
        %s1262 = smul.addr %s1261, 4
        %s1263 = smul.addr %s1262, 8
        %s1264 = scalar_lea.vmem %s7, %s1263
      $region64: #{block_forward.4} parent=55 // pred_fallthru
        _
    $region56: #{block_forward.4} parent=5 // pred_fallthru
      _
  $region6: #{block_forward.4} parent=0 // loop_footer
    %s18 = sadd.s32 1, %s14
  $region7: #{block_forward.4} parent=0 // loop_footer_branch
    %13 = sbr.rel target = $region3
  $region8: #{block_forward.4} parent=0 // loop_exit
    _

</llo_original>
